<compile_context>
chip_gen: v5e
topology: v5e:2x2
jax: 0.10.0
libtpu: 0.0.40
codegen_flags: <defaults>
</compile_context>

<pallas_src>
import functools

import jax
import jax.numpy as jnp
from jax.experimental import pallas as pl
from jax.experimental.pallas import tpu as pltpu

EPS = 1e-5


# --------------------------------------------------------------------------
# in-kernel helpers
# --------------------------------------------------------------------------
def _pad_into(pad_ref, interior, Ho, Wo):
    """Write `interior` (Ho, Wo, C) into the centre of pad_ref (Ho+2, Wo+2, C)
    and zero only the 1-pixel border (no full zero-fill pass)."""
    C = pad_ref.shape[-1]
    dt = pad_ref.dtype
    zrow = jnp.zeros((1, Wo + 2, C), dt)
    zcol = jnp.zeros((Ho, 1, C), dt)
    pad_ref[0:1, :, :] = zrow
    pad_ref[Ho + 1:Ho + 2, :, :] = zrow
    pad_ref[1:Ho + 1, 0:1, :] = zcol
    pad_ref[1:Ho + 1, Wo + 1:Wo + 2, :] = zcol
    pad_ref[1:Ho + 1, 1:Wo + 1, :] = interior.astype(dt)


def _im2col(patch_ref, pad_ref, Ho, Wo):
    """patch[m, (3*dy+dx)*C : +C] = pad[ho+dy, wo+dx, :],  m = ho*Wo + wo."""
    C = pad_ref.shape[-1]
    M = Ho * Wo
    for dy in range(3):
        for dx in range(3):
            k = 3 * dy + dx
            patch_ref[:, k * C:(k + 1) * C] = (
                pad_ref[dy:dy + Ho, dx:dx + Wo, :].reshape(M, C))


# --------------------------------------------------------------------------
# pass 1: 2x2 maxpool + conv1 (im2col, single MXU matmul) + BN1 partial stats
# --------------------------------------------------------------------------
def _pool_conv1_kernel(x_ref, w1_ref, y1_ref, st1_ref, pad_ref, patch_ref):
    H, W, Cin = x_ref.shape                      # batch dim squeezed by BlockSpec
    Ho, Wo = H // 2, W // 2

    # 2x2 max-pool, stride 2 (f32 VPU).  W-direction via two strided sublane
    # reads, H-direction via a free leading-dim split.
    even = x_ref[:, pl.ds(0, Wo, stride=2), :]   # (H, Wo, Cin)
    odd = x_ref[:, pl.ds(1, Wo, stride=2), :]
    mw = jnp.maximum(even, odd)
    mh = mw.reshape(Ho, 2, Wo, Cin)
    pooled = jnp.maximum(mh[:, 0], mh[:, 1])     # (Ho, Wo, Cin)

    _pad_into(pad_ref, pooled, Ho, Wo)
    _im2col(patch_ref, pad_ref, Ho, Wo)

    # One MXU matmul with K = 9*Cin; bf16 operands, f32 accumulation.
    y = jnp.dot(patch_ref[...].astype(w1_ref.dtype), w1_ref[...],
                preferred_element_type=jnp.float32)          # (M, Cmid)

    # Single-pass BN partial stats for this block (sum, sum of squares), f32.
    st1_ref[0:1, :] = jnp.sum(y, axis=0, keepdims=True)
    st1_ref[1:2, :] = jnp.sum(y * y, axis=0, keepdims=True)
    y1_ref[...] = y.astype(y1_ref.dtype)         # bf16 on fast path (HBM traffic)


# --------------------------------------------------------------------------
# pass 2: fused BN1+ReLU (folded scale/shift FMA) + conv2 + BN2 partial stats
# --------------------------------------------------------------------------
def _bnrelu_conv2_kernel(y1_ref, aff1_ref, w2_ref, y2_ref, st2_ref,
                         pad_ref, patch_ref):
    M, Cmid = y1_ref.shape
    Ho = pad_ref.shape[0] - 2
    Wo = pad_ref.shape[1] - 2

    # BN1 + ReLU as a single f32 FMA + max (scale/shift pre-folded in wrapper).
    a1 = aff1_ref[0:1, :]
    c1 = aff1_ref[1:2, :]
    h1 = jnp.maximum(y1_ref[...].astype(jnp.float32) * a1 + c1, 0.0)

    _pad_into(pad_ref, h1.reshape(Ho, Wo, Cmid), Ho, Wo)
    _im2col(patch_ref, pad_ref, Ho, Wo)

    y = jnp.dot(patch_ref[...].astype(w2_ref.dtype), w2_ref[...],
                preferred_element_type=jnp.float32)          # (M, Cout)

    st2_ref[0:1, :] = jnp.sum(y, axis=0, keepdims=True)
    st2_ref[1:2, :] = jnp.sum(y * y, axis=0, keepdims=True)
    y2_ref[...] = y.astype(y2_ref.dtype)


# --------------------------------------------------------------------------
# pass 3: fused BN2+ReLU, output written directly in flattened-NCHW layout
# --------------------------------------------------------------------------
def _bnrelu_out_kernel(y2_ref, aff2_ref, o_ref):
    a2 = aff2_ref[0:1, :]
    c2 = aff2_ref[1:2, :]
    t = jnp.maximum(y2_ref[...].astype(jnp.float32) * a2 + c2, 0.0)   # (M, Cout)
    # In-register transpose: output tile is (Cout, M).  Last dim M = Ho*Wo is
    # lane-dense (>=128 at real UNet sizes) and the wrapper reshape to
    # (N, Cout, Ho, Wo) is free -> no output-sized XLA transpose afterwards.
    o_ref[...] = jnp.transpose(t).astype(o_ref.dtype)


# --------------------------------------------------------------------------
# wrapper
# --------------------------------------------------------------------------
def _bn_fold(stats, count, gamma, beta):
    """Finalize train-mode BN from per-block (sum, sumsq) partials and fold the
    affine params into a single per-channel scale/shift (tiny O(C) XLA work).
    Returns a (2, C) array: row 0 = scale, row 1 = shift."""
    s = jnp.sum(stats[:, 0, :], axis=0)
    ss = jnp.sum(stats[:, 1, :], axis=0)
    mean = s / count
    var = jnp.maximum(ss / count - mean * mean, 0.0)
    inv = jax.lax.rsqrt(var + EPS)
    a = gamma * inv
    c = beta - mean * a
    return jnp.stack([a, c], axis=0)


@functools.partial(jax.jit, static_argnames=("mxu_dtype",))
def down_forward(x_nchw, w1_oihw, g1, b1, w2_oihw, g2, b2,
                 *, mxu_dtype=jnp.bfloat16):
    """Down.forward: (N, Cin, H, W) NCHW -> (N, Cout, H//2, W//2) NCHW."""
    N, Cin, H, W = x_nchw.shape
    Cmid = w1_oihw.shape[0]
    Cout = w2_oihw.shape[0]
    Ho, Wo = H // 2, W // 2
    M = Ho * Wo

    # Layout glue: NCHW -> NHWC activations; OIHW -> (9*Cin, Cout) im2col
    # weights in the MXU input dtype (bf16 on v6e/v7x; accumulation stays f32).
    x = jnp.transpose(x_nchw, (0, 2, 3, 1)).astype(jnp.float32)
    w1c = jnp.transpose(w1_oihw, (2, 3, 1, 0)).reshape(9 * Cin, Cmid).astype(mxu_dtype)
    w2c = jnp.transpose(w2_oihw, (2, 3, 1, 0)).reshape(9 * Cmid, Cout).astype(mxu_dtype)

    # Inter-pass activations live in the MXU dtype: halves HBM traffic between
    # passes on the bf16 path; stays f32 on the exact validation path.
    inter_dtype = mxu_dtype

    cparams = pltpu.CompilerParams(
        dimension_semantics=("parallel",),        # shard batch over v7x's 2 TCs
        vmem_limit_bytes=48 * 1024 * 1024,        # budgeted for v7x's 64 MiB VMEM
    )

    # ---- pass 1: maxpool + conv1 (+ BN1 partial stats) ----
    y1, st1 = pl.pallas_call(
        _pool_conv1_kernel,
        grid_spec=pltpu.PrefetchScalarGridSpec(
            num_scalar_prefetch=0,
            grid=(N,),
            in_specs=[
                pl.BlockSpec((None, H, W, Cin), lambda n: (n, 0, 0, 0)),
                pl.BlockSpec((9 * Cin, Cmid), lambda n: (0, 0)),
            ],
            out_specs=[
                pl.BlockSpec((None, M, Cmid), lambda n: (n, 0, 0)),
                pl.BlockSpec((None, 2, Cmid), lambda n: (n, 0, 0)),
            ],
            scratch_shapes=[
                pltpu.VMEM((Ho + 2, Wo + 2, Cin), jnp.float32),   # padded pool out
                pltpu.VMEM((M, 9 * Cin), jnp.float32),            # im2col patches
            ]),
        out_shape=(jax.ShapeDtypeStruct((N, M, Cmid), inter_dtype),
                   jax.ShapeDtypeStruct((N, 2, Cmid), jnp.float32)),
        compiler_params=cparams,
    )(x, w1c)

    aff1 = _bn_fold(st1, float(N * M), g1, b1)            # (2, Cmid)

    # ---- pass 2: BN1+ReLU + conv2 (+ BN2 partial stats) ----
    y2, st2 = pl.pallas_call(
        _bnrelu_conv2_kernel,
        grid_spec=pltpu.PrefetchScalarGridSpec(
            num_scalar_prefetch=0,
            grid=(N,),
            in_specs=[
                pl.BlockSpec((None, M, Cmid), lambda n: (n, 0, 0)),
                pl.BlockSpec((2, Cmid), lambda n: (0, 0)),
                pl.BlockSpec((9 * Cmid, Cout), lambda n: (0, 0)),
            ],
            out_specs=[
                pl.BlockSpec((None, M, Cout), lambda n: (n, 0, 0)),
                pl.BlockSpec((None, 2, Cout), lambda n: (n, 0, 0)),
            ],
            scratch_shapes=[
                pltpu.VMEM((Ho + 2, Wo + 2, Cmid), jnp.float32),
                pltpu.VMEM((M, 9 * Cmid), jnp.float32),
            ]),
        out_shape=(jax.ShapeDtypeStruct((N, M, Cout), inter_dtype),
                   jax.ShapeDtypeStruct((N, 2, Cout), jnp.float32)),
        compiler_params=cparams,
    )(y1, aff1, w2c)

    aff2 = _bn_fold(st2, float(N * M), g2, b2)             # (2, Cout)

    # ---- pass 3: BN2+ReLU, output directly as (N, Cout, Ho*Wo) ----
    out_ncm = pl.pallas_call(
        _bnrelu_out_kernel,
        grid_spec=pltpu.PrefetchScalarGridSpec(
            num_scalar_prefetch=0,
            grid=(N,),
            in_specs=[
                pl.BlockSpec((None, M, Cout), lambda n: (n, 0, 0)),
                pl.BlockSpec((2, Cout), lambda n: (0, 0)),
            ],
            out_specs=pl.BlockSpec((None, Cout, M), lambda n: (n, 0, 0)),
        ),
        out_shape=jax.ShapeDtypeStruct((N, Cout, M), jnp.float32),
        compiler_params=cparams,
    )(y2, aff2)

    return out_ncm.reshape(N, Cout, Ho, Wo)                # free reshape -> NCHW


# --------------------------------------------------------------------------
# pure-JAX reference (same math as the PyTorch module in train mode)
# --------------------------------------------------------------------------
def down_reference(x_nchw, w1, g1, b1, w2, g2, b2):
    def block(h, w, g, b):
        y = jax.lax.conv_general_dilated(
            h, w, window_strides=(1, 1), padding="SAME",
            dimension_numbers=("NCHW", "OIHW", "NCHW"),
            precision=jax.lax.Precision.HIGHEST)
        mean = y.mean(axis=(0, 2, 3), keepdims=True)
        var = ((y - mean) ** 2).mean(axis=(0, 2, 3), keepdims=True)
        y = (y - mean) * jax.lax.rsqrt(var + EPS)
        y = y * g.reshape(1, -1, 1, 1) + b.reshape(1, -1, 1, 1)
        return jnp.maximum(y, 0.0)

    N, C, H, W = x_nchw.shape
    p = x_nchw.reshape(N, C, H // 2, 2, W // 2, 2).max(axis=(3, 5))
    h = block(p, w1, g1, b1)
    return block(h, w2, g2, b2)


if __name__ == "__main__":
    key = jax.random.PRNGKey(0)
    N, Cin, H, W = 2, 4, 16, 16
    Cout = 8                         # mid_channels == out_channels in DoubleConv
    k1, k2, kx = jax.random.split(key, 3)

    # Deterministic parameters (conv bias=False; fresh BN: gamma=1, beta=0).
    w1 = jax.random.uniform(k1, (Cout, Cin, 3, 3), jnp.float32, -1.0, 1.0) \
        / jnp.sqrt(float(Cin * 9))
    w2 = jax.random.uniform(k2, (Cout, Cout, 3, 3), jnp.float32, -1.0, 1.0) \
        / jnp.sqrt(float(Cout * 9))
    g1 = jnp.ones((Cout,), jnp.float32)
    b1 = jnp.zeros((Cout,), jnp.float32)
    g2 = jnp.ones((Cout,), jnp.float32)
    b2 = jnp.zeros((Cout,), jnp.float32)
    x = jax.random.normal(kx, (N, Cin, H, W), jnp.float32)

    ref = down_reference(x, w1, g1, b1, w2, g2, b2)

    # Exact-math path (f32 MXU operands, f32 intermediates) — tight check.
    out_f32 = jax.block_until_ready(
        down_forward(x, w1, g1, b1, w2, g2, b2, mxu_dtype=jnp.float32))
    assert out_f32.shape == (N, Cout, H // 2, W // 2), out_f32.shape
    err32 = float(jnp.max(jnp.abs(out_f32 - ref)))
    if err32 > 2e-2:
        raise AssertionError(f"f32 path mismatch vs reference, max abs err = {err32}")

    # Optimized path (bf16 MXU operands + bf16 intermediates, f32 accum/BN).
    out_bf = jax.block_until_ready(
        down_forward(x, w1, g1, b1, w2, g2, b2, mxu_dtype=jnp.bfloat16))
    errbf = float(jnp.max(jnp.abs(out_bf - ref)))
    rel_rms = float(jnp.sqrt(jnp.mean((out_bf - ref) ** 2))
                    / (jnp.sqrt(jnp.mean(ref ** 2)) + 1e-12))
    if errbf > 2e-1 or rel_rms > 5e-2:
        raise AssertionError(
            f"bf16 path mismatch, max abs err = {errbf}, rel rms = {rel_rms}")

    print("KERNEL_OK")
</pallas_src>

<mosaic_0001>
module attributes {stable_mosaic.version = 11 : i64} {
  func.func @_pool_conv1_kernel(%arg0: i32, %arg1: memref<1x16x16x4xf32, #tpu.memory_space<vmem>>, %arg2: memref<36x8xf32, #tpu.memory_space<vmem>>, %arg3: memref<1x64x8xf32, #tpu.memory_space<vmem>>, %arg4: memref<1x2x8xf32, #tpu.memory_space<vmem>>, %arg5: memref<10x10x4xf32, #tpu.memory_space<vmem>>, %arg6: memref<64x36xf32, #tpu.memory_space<vmem>>) attributes {dimension_semantics = [#tpu.dimension_semantics<parallel>], iteration_bounds = array<i64: 2>, scalar_prefetch = 0 : i64, scratch_operands = 2 : i64, tpu.core_type = #tpu.core_type<tc>, window_params = [{transform_indices = @transform_0, window_bounds = array<i64: 1, 16, 16, 4>}, {pipeline_mode = #tpu.pipeline_mode<synchronous>, transform_indices = @transform_1, window_bounds = array<i64: 36, 8>}, {transform_indices = @transform_2, window_bounds = array<i64: 1, 64, 8>}, {transform_indices = @transform_3, window_bounds = array<i64: 1, 2, 8>}]} {
    %c0 = arith.constant 0 : index
    %c0_0 = arith.constant 0 : index
    %c0_1 = arith.constant 0 : index
    %c0_2 = arith.constant 0 : index
    %0 = tpu.strided_load %arg1[%c0, %c0_0, %c0_1, %c0_2] {strides = array<i32: 1, 1, 2, 1>} : memref<1x16x16x4xf32, #tpu.memory_space<vmem>>, vector<1x16x8x4xf32>
    %1 = vector.shape_cast %0 : vector<1x16x8x4xf32> to vector<16x8x4xf32>
    %c0_3 = arith.constant 0 : index
    %c0_4 = arith.constant 0 : index
    %c1 = arith.constant 1 : index
    %c0_5 = arith.constant 0 : index
    %2 = tpu.strided_load %arg1[%c0_3, %c0_4, %c1, %c0_5] {strides = array<i32: 1, 1, 2, 1>} : memref<1x16x16x4xf32, #tpu.memory_space<vmem>>, vector<1x16x8x4xf32>
    %3 = vector.shape_cast %2 : vector<1x16x8x4xf32> to vector<16x8x4xf32>
    %4 = arith.maximumf %1, %3 : vector<16x8x4xf32>
    %5 = vector.shape_cast %4 : vector<16x8x4xf32> to vector<8x2x8x4xf32>
    %6 = vector.extract_strided_slice %5 {offsets = [0, 0, 0, 0], sizes = [8, 1, 8, 4], strides = [1, 1, 1, 1]} : vector<8x2x8x4xf32> to vector<8x1x8x4xf32>
    %7 = vector.shape_cast %6 : vector<8x1x8x4xf32> to vector<8x8x4xf32>
    %8 = vector.extract_strided_slice %5 {offsets = [0, 1, 0, 0], sizes = [8, 1, 8, 4], strides = [1, 1, 1, 1]} : vector<8x2x8x4xf32> to vector<8x1x8x4xf32>
    %9 = vector.shape_cast %8 : vector<8x1x8x4xf32> to vector<8x8x4xf32>
    %10 = arith.maximumf %7, %9 : vector<8x8x4xf32>
    %cst = arith.constant 0.000000e+00 : f32
    %11 = vector.broadcast %cst : f32 to vector<1x10x4xf32>
    %cst_6 = arith.constant 0.000000e+00 : f32
    %12 = vector.broadcast %cst_6 : f32 to vector<8x1x4xf32>
    %c0_7 = arith.constant 0 : index
    %c0_8 = arith.constant 0 : index
    %c0_9 = arith.constant 0 : index
    %13 = vector.load %arg5[%c0_7, %c0_8, %c0_9] : memref<10x10x4xf32, #tpu.memory_space<vmem>>, vector<1x10x4xf32>
    tpu.vector_store %arg5[%c0_7, %c0_8, %c0_9], %11 {strides = array<i32>} : memref<10x10x4xf32, #tpu.memory_space<vmem>>, vector<1x10x4xf32>,
    %c9 = arith.constant 9 : index
    %c0_10 = arith.constant 0 : index
    %c0_11 = arith.constant 0 : index
    %14 = vector.load %arg5[%c9, %c0_10, %c0_11] : memref<10x10x4xf32, #tpu.memory_space<vmem>>, vector<1x10x4xf32>
    tpu.vector_store %arg5[%c9, %c0_10, %c0_11], %11 {strides = array<i32>} : memref<10x10x4xf32, #tpu.memory_space<vmem>>, vector<1x10x4xf32>,
    %c1_12 = arith.constant 1 : index
    %c0_13 = arith.constant 0 : index
    %c0_14 = arith.constant 0 : index
    %15 = vector.load %arg5[%c1_12, %c0_13, %c0_14] : memref<10x10x4xf32, #tpu.memory_space<vmem>>, vector<8x1x4xf32>
    tpu.vector_store %arg5[%c1_12, %c0_13, %c0_14], %12 {strides = array<i32>} : memref<10x10x4xf32, #tpu.memory_space<vmem>>, vector<8x1x4xf32>,
    %c1_15 = arith.constant 1 : index
    %c9_16 = arith.constant 9 : index
    %c0_17 = arith.constant 0 : index
    %16 = vector.load %arg5[%c1_15, %c9_16, %c0_17] : memref<10x10x4xf32, #tpu.memory_space<vmem>>, vector<8x1x4xf32>
    tpu.vector_store %arg5[%c1_15, %c9_16, %c0_17], %12 {strides = array<i32>} : memref<10x10x4xf32, #tpu.memory_space<vmem>>, vector<8x1x4xf32>,
    %c1_18 = arith.constant 1 : index
    %c1_19 = arith.constant 1 : index
    %c0_20 = arith.constant 0 : index
    %17 = vector.load %arg5[%c1_18, %c1_19, %c0_20] : memref<10x10x4xf32, #tpu.memory_space<vmem>>, vector<8x8x4xf32>
    tpu.vector_store %arg5[%c1_18, %c1_19, %c0_20], %10 {strides = array<i32>} : memref<10x10x4xf32, #tpu.memory_space<vmem>>, vector<8x8x4xf32>,
    %c0_21 = arith.constant 0 : index
    %c0_22 = arith.constant 0 : index
    %c0_23 = arith.constant 0 : index
    %18 = vector.load %arg5[%c0_21, %c0_22, %c0_23] : memref<10x10x4xf32, #tpu.memory_space<vmem>>, vector<8x8x4xf32>
    %19 = vector.shape_cast %18 : vector<8x8x4xf32> to vector<64x4xf32>
    %c0_24 = arith.constant 0 : index
    %c0_25 = arith.constant 0 : index
    %20 = vector.load %arg6[%c0_24, %c0_25] : memref<64x36xf32, #tpu.memory_space<vmem>>, vector<64x4xf32>
    tpu.vector_store %arg6[%c0_24, %c0_25], %19 {strides = array<i32>} : memref<64x36xf32, #tpu.memory_space<vmem>>, vector<64x4xf32>,
    %c0_26 = arith.constant 0 : index
    %c1_27 = arith.constant 1 : index
    %c0_28 = arith.constant 0 : index
    %21 = vector.load %arg5[%c0_26, %c1_27, %c0_28] : memref<10x10x4xf32, #tpu.memory_space<vmem>>, vector<8x8x4xf32>
    %22 = vector.shape_cast %21 : vector<8x8x4xf32> to vector<64x4xf32>
    %c0_29 = arith.constant 0 : index
    %c4 = arith.constant 4 : index
    %23 = vector.load %arg6[%c0_29, %c4] : memref<64x36xf32, #tpu.memory_space<vmem>>, vector<64x4xf32>
    tpu.vector_store %arg6[%c0_29, %c4], %22 {strides = array<i32>} : memref<64x36xf32, #tpu.memory_space<vmem>>, vector<64x4xf32>,
    %c0_30 = arith.constant 0 : index
    %c2 = arith.constant 2 : index
    %c0_31 = arith.constant 0 : index
    %24 = vector.load %arg5[%c0_30, %c2, %c0_31] : memref<10x10x4xf32, #tpu.memory_space<vmem>>, vector<8x8x4xf32>
    %25 = vector.shape_cast %24 : vector<8x8x4xf32> to vector<64x4xf32>
    %c0_32 = arith.constant 0 : index
    %c8 = arith.constant 8 : index
    %26 = vector.load %arg6[%c0_32, %c8] : memref<64x36xf32, #tpu.memory_space<vmem>>, vector<64x4xf32>
    tpu.vector_store %arg6[%c0_32, %c8], %25 {strides = array<i32>} : memref<64x36xf32, #tpu.memory_space<vmem>>, vector<64x4xf32>,
    %c1_33 = arith.constant 1 : index
    %c0_34 = arith.constant 0 : index
    %c0_35 = arith.constant 0 : index
    %27 = vector.load %arg5[%c1_33, %c0_34, %c0_35] : memref<10x10x4xf32, #tpu.memory_space<vmem>>, vector<8x8x4xf32>
    %28 = vector.shape_cast %27 : vector<8x8x4xf32> to vector<64x4xf32>
    %c0_36 = arith.constant 0 : index
    %c12 = arith.constant 12 : index
    %29 = vector.load %arg6[%c0_36, %c12] : memref<64x36xf32, #tpu.memory_space<vmem>>, vector<64x4xf32>
    tpu.vector_store %arg6[%c0_36, %c12], %28 {strides = array<i32>} : memref<64x36xf32, #tpu.memory_space<vmem>>, vector<64x4xf32>,
    %c1_37 = arith.constant 1 : index
    %c1_38 = arith.constant 1 : index
    %c0_39 = arith.constant 0 : index
    %30 = vector.load %arg5[%c1_37, %c1_38, %c0_39] : memref<10x10x4xf32, #tpu.memory_space<vmem>>, vector<8x8x4xf32>
    %31 = vector.shape_cast %30 : vector<8x8x4xf32> to vector<64x4xf32>
    %c0_40 = arith.constant 0 : index
    %c16 = arith.constant 16 : index
    %32 = vector.load %arg6[%c0_40, %c16] : memref<64x36xf32, #tpu.memory_space<vmem>>, vector<64x4xf32>
    tpu.vector_store %arg6[%c0_40, %c16], %31 {strides = array<i32>} : memref<64x36xf32, #tpu.memory_space<vmem>>, vector<64x4xf32>,
    %c1_41 = arith.constant 1 : index
    %c2_42 = arith.constant 2 : index
    %c0_43 = arith.constant 0 : index
    %33 = vector.load %arg5[%c1_41, %c2_42, %c0_43] : memref<10x10x4xf32, #tpu.memory_space<vmem>>, vector<8x8x4xf32>
    %34 = vector.shape_cast %33 : vector<8x8x4xf32> to vector<64x4xf32>
    %c0_44 = arith.constant 0 : index
    %c20 = arith.constant 20 : index
    %35 = vector.load %arg6[%c0_44, %c20] : memref<64x36xf32, #tpu.memory_space<vmem>>, vector<64x4xf32>
    tpu.vector_store %arg6[%c0_44, %c20], %34 {strides = array<i32>} : memref<64x36xf32, #tpu.memory_space<vmem>>, vector<64x4xf32>,
    %c2_45 = arith.constant 2 : index
    %c0_46 = arith.constant 0 : index
    %c0_47 = arith.constant 0 : index
    %36 = vector.load %arg5[%c2_45, %c0_46, %c0_47] : memref<10x10x4xf32, #tpu.memory_space<vmem>>, vector<8x8x4xf32>
    %37 = vector.shape_cast %36 : vector<8x8x4xf32> to vector<64x4xf32>
    %c0_48 = arith.constant 0 : index
    %c24 = arith.constant 24 : index
    %38 = vector.load %arg6[%c0_48, %c24] : memref<64x36xf32, #tpu.memory_space<vmem>>, vector<64x4xf32>
    tpu.vector_store %arg6[%c0_48, %c24], %37 {strides = array<i32>} : memref<64x36xf32, #tpu.memory_space<vmem>>, vector<64x4xf32>,
    %c2_49 = arith.constant 2 : index
    %c1_50 = arith.constant 1 : index
    %c0_51 = arith.constant 0 : index
    %39 = vector.load %arg5[%c2_49, %c1_50, %c0_51] : memref<10x10x4xf32, #tpu.memory_space<vmem>>, vector<8x8x4xf32>
    %40 = vector.shape_cast %39 : vector<8x8x4xf32> to vector<64x4xf32>
    %c0_52 = arith.constant 0 : index
    %c28 = arith.constant 28 : index
    %41 = vector.load %arg6[%c0_52, %c28] : memref<64x36xf32, #tpu.memory_space<vmem>>, vector<64x4xf32>
    tpu.vector_store %arg6[%c0_52, %c28], %40 {strides = array<i32>} : memref<64x36xf32, #tpu.memory_space<vmem>>, vector<64x4xf32>,
    %c2_53 = arith.constant 2 : index
    %c2_54 = arith.constant 2 : index
    %c0_55 = arith.constant 0 : index
    %42 = vector.load %arg5[%c2_53, %c2_54, %c0_55] : memref<10x10x4xf32, #tpu.memory_space<vmem>>, vector<8x8x4xf32>
    %43 = vector.shape_cast %42 : vector<8x8x4xf32> to vector<64x4xf32>
    %c0_56 = arith.constant 0 : index
    %c32 = arith.constant 32 : index
    %44 = vector.load %arg6[%c0_56, %c32] : memref<64x36xf32, #tpu.memory_space<vmem>>, vector<64x4xf32>
    tpu.vector_store %arg6[%c0_56, %c32], %43 {strides = array<i32>} : memref<64x36xf32, #tpu.memory_space<vmem>>, vector<64x4xf32>,
    %c0_57 = arith.constant 0 : index
    %c0_58 = arith.constant 0 : index
    %45 = vector.load %arg6[%c0_57, %c0_58] : memref<64x36xf32, #tpu.memory_space<vmem>>, vector<64x36xf32>
    %c0_59 = arith.constant 0 : index
    %c0_60 = arith.constant 0 : index
    %46 = vector.load %arg2[%c0_59, %c0_60] : memref<36x8xf32, #tpu.memory_space<vmem>>, vector<36x8xf32>
    %cst_61 = arith.constant dense<0.000000e+00> : vector<64x8xf32>
    %47 = tpu.matmul %45, %46, %cst_61 {dimension_numbers = #tpu.dot_dimension_numbers<[1], [0], [0], [1], [0, 0, 1, 1], [], []>} : vector<64x36xf32>, vector<36x8xf32>, vector<64x8xf32> -> vector<64x8xf32>
    %cst_62 = arith.constant dense<0.000000e+00> : vector<8xf32>
    %48 = vector.multi_reduction <add>, %47, %cst_62 [0] : vector<64x8xf32> to vector<8xf32>
    %49 = vector.shape_cast %48 : vector<8xf32> to vector<1x8xf32>
    %c0_63 = arith.constant 0 : index
    %c0_64 = arith.constant 0 : index
    %c0_65 = arith.constant 0 : index
    %50 = vector.load %arg4[%c0_63, %c0_64, %c0_65] : memref<1x2x8xf32, #tpu.memory_space<vmem>>, vector<1x1x8xf32>
    %51 = vector.shape_cast %50 : vector<1x1x8xf32> to vector<1x8xf32>
    %52 = vector.shape_cast %49 : vector<1x8xf32> to vector<1x1x8xf32>
    tpu.vector_store %arg4[%c0_63, %c0_64, %c0_65], %52 {strides = array<i32>} : memref<1x2x8xf32, #tpu.memory_space<vmem>>, vector<1x1x8xf32>,
    %53 = arith.mulf %47, %47 : vector<64x8xf32>
    %cst_66 = arith.constant dense<0.000000e+00> : vector<8xf32>
    %54 = vector.multi_reduction <add>, %53, %cst_66 [0] : vector<64x8xf32> to vector<8xf32>
    %55 = vector.shape_cast %54 : vector<8xf32> to vector<1x8xf32>
    %c0_67 = arith.constant 0 : index
    %c1_68 = arith.constant 1 : index
    %c0_69 = arith.constant 0 : index
    %56 = vector.load %arg4[%c0_67, %c1_68, %c0_69] : memref<1x2x8xf32, #tpu.memory_space<vmem>>, vector<1x1x8xf32>
    %57 = vector.shape_cast %56 : vector<1x1x8xf32> to vector<1x8xf32>
    %58 = vector.shape_cast %55 : vector<1x8xf32> to vector<1x1x8xf32>
    tpu.vector_store %arg4[%c0_67, %c1_68, %c0_69], %58 {strides = array<i32>} : memref<1x2x8xf32, #tpu.memory_space<vmem>>, vector<1x1x8xf32>,
    %c0_70 = arith.constant 0 : index
    %c0_71 = arith.constant 0 : index
    %c0_72 = arith.constant 0 : index
    %59 = vector.load %arg3[%c0_70, %c0_71, %c0_72] : memref<1x64x8xf32, #tpu.memory_space<vmem>>, vector<1x64x8xf32>
    %60 = vector.shape_cast %59 : vector<1x64x8xf32> to vector<64x8xf32>
    %61 = vector.shape_cast %47 : vector<64x8xf32> to vector<1x64x8xf32>
    tpu.vector_store %arg3[%c0_70, %c0_71, %c0_72], %61 {strides = array<i32>} : memref<1x64x8xf32, #tpu.memory_space<vmem>>, vector<1x64x8xf32>,
    return
  }
  func.func @transform_0(%arg0: i32) -> (i32, i32, i32, i32) {
    %c0_i32 = arith.constant 0 : i32
    %c0_i32_0 = arith.constant 0 : i32
    %c0_i32_1 = arith.constant 0 : i32
    %c0_i32_2 = arith.constant 0 : i32
    return %arg0, %c0_i32, %c0_i32_0, %c0_i32_1 : i32, i32, i32, i32
  }
  func.func @transform_1(%arg0: i32) -> (i32, i32) {
    %c0_i32 = arith.constant 0 : i32
    %c0_i32_0 = arith.constant 0 : i32
    %c0_i32_1 = arith.constant 0 : i32
    return %c0_i32, %c0_i32_0 : i32, i32
  }
  func.func @transform_2(%arg0: i32) -> (i32, i32, i32) {
    %c0_i32 = arith.constant 0 : i32
    %c0_i32_0 = arith.constant 0 : i32
    %c0_i32_1 = arith.constant 0 : i32
    return %arg0, %c0_i32, %c0_i32_0 : i32, i32, i32
  }
  func.func @transform_3(%arg0: i32) -> (i32, i32, i32) {
    %c0_i32 = arith.constant 0 : i32
    %c0_i32_0 = arith.constant 0 : i32
    %c0_i32_1 = arith.constant 0 : i32
    return %arg0, %c0_i32, %c0_i32_0 : i32, i32, i32
  }
}

module attributes {stable_mosaic.version = 11 : i64} {
  func.func @_bnrelu_out_kernel(%arg0: i32, %arg1: memref<1x64x8xf32, #tpu.memory_space<vmem>>, %arg2: memref<2x8xf32, #tpu.memory_space<vmem>>, %arg3: memref<1x8x64xf32, #tpu.memory_space<vmem>>) attributes {dimension_semantics = [#tpu.dimension_semantics<parallel>], iteration_bounds = array<i64: 2>, scalar_prefetch = 0 : i64, scratch_operands = 0 : i64, tpu.core_type = #tpu.core_type<tc>, window_params = [{transform_indices = @transform_0, window_bounds = array<i64: 1, 64, 8>}, {pipeline_mode = #tpu.pipeline_mode<synchronous>, transform_indices = @transform_1, window_bounds = array<i64: 2, 8>}, {transform_indices = @transform_2, window_bounds = array<i64: 1, 8, 64>}]} {
    %c0 = arith.constant 0 : index
    %c0_0 = arith.constant 0 : index
    %0 = vector.load %arg2[%c0, %c0_0] : memref<2x8xf32, #tpu.memory_space<vmem>>, vector<1x8xf32>
    %c1 = arith.constant 1 : index
    %c0_1 = arith.constant 0 : index
    %1 = vector.load %arg2[%c1, %c0_1] : memref<2x8xf32, #tpu.memory_space<vmem>>, vector<1x8xf32>
    %c0_2 = arith.constant 0 : index
    %c0_3 = arith.constant 0 : index
    %c0_4 = arith.constant 0 : index
    %2 = vector.load %arg1[%c0_2, %c0_3, %c0_4] : memref<1x64x8xf32, #tpu.memory_space<vmem>>, vector<1x64x8xf32>
    %3 = vector.shape_cast %2 : vector<1x64x8xf32> to vector<64x8xf32>
    %4 = vector.broadcast %0 : vector<1x8xf32> to vector<64x8xf32>
    %5 = arith.mulf %3, %4 : vector<64x8xf32>
    %6 = vector.broadcast %1 : vector<1x8xf32> to vector<64x8xf32>
    %7 = arith.addf %5, %6 : vector<64x8xf32>
    %cst = arith.constant 0.000000e+00 : f32
    %8 = vector.broadcast %cst : f32 to vector<64x8xf32>
    %9 = arith.maximumf %7, %8 : vector<64x8xf32>
    %10 = tpu.transpose %9, [1, 0] : vector<64x8xf32> -> vector<8x64xf32>
    %c0_5 = arith.constant 0 : index
    %c0_6 = arith.constant 0 : index
    %c0_7 = arith.constant 0 : index
    %11 = vector.load %arg3[%c0_5, %c0_6, %c0_7] : memref<1x8x64xf32, #tpu.memory_space<vmem>>, vector<1x8x64xf32>
    %12 = vector.shape_cast %11 : vector<1x8x64xf32> to vector<8x64xf32>
    %13 = vector.shape_cast %10 : vector<8x64xf32> to vector<1x8x64xf32>
    tpu.vector_store %arg3[%c0_5, %c0_6, %c0_7], %13 {strides = array<i32>} : memref<1x8x64xf32, #tpu.memory_space<vmem>>, vector<1x8x64xf32>,
    return
  }
  func.func @transform_0(%arg0: i32) -> (i32, i32, i32) {
    %c0_i32 = arith.constant 0 : i32
    %c0_i32_0 = arith.constant 0 : i32
    %c0_i32_1 = arith.constant 0 : i32
    return %arg0, %c0_i32, %c0_i32_0 : i32, i32, i32
  }
  func.func @transform_1(%arg0: i32) -> (i32, i32) {
    %c0_i32 = arith.constant 0 : i32
    %c0_i32_0 = arith.constant 0 : i32
    %c0_i32_1 = arith.constant 0 : i32
    return %c0_i32, %c0_i32_0 : i32, i32
  }
  func.func @transform_2(%arg0: i32) -> (i32, i32, i32) {
    %c0_i32 = arith.constant 0 : i32
    %c0_i32_0 = arith.constant 0 : i32
    %c0_i32_1 = arith.constant 0 : i32
    return %arg0, %c0_i32, %c0_i32_0 : i32, i32, i32
  }
}

module attributes {stable_mosaic.version = 11 : i64} {
  func.func @_bnrelu_conv2_kernel(%arg0: i32, %arg1: memref<1x64x8xf32, #tpu.memory_space<vmem>>, %arg2: memref<2x8xf32, #tpu.memory_space<vmem>>, %arg3: memref<72x8xf32, #tpu.memory_space<vmem>>, %arg4: memref<1x64x8xf32, #tpu.memory_space<vmem>>, %arg5: memref<1x2x8xf32, #tpu.memory_space<vmem>>, %arg6: memref<10x10x8xf32, #tpu.memory_space<vmem>>, %arg7: memref<64x72xf32, #tpu.memory_space<vmem>>) attributes {dimension_semantics = [#tpu.dimension_semantics<parallel>], iteration_bounds = array<i64: 2>, scalar_prefetch = 0 : i64, scratch_operands = 2 : i64, tpu.core_type = #tpu.core_type<tc>, window_params = [{transform_indices = @transform_0, window_bounds = array<i64: 1, 64, 8>}, {pipeline_mode = #tpu.pipeline_mode<synchronous>, transform_indices = @transform_1, window_bounds = array<i64: 2, 8>}, {pipeline_mode = #tpu.pipeline_mode<synchronous>, transform_indices = @transform_2, window_bounds = array<i64: 72, 8>}, {transform_indices = @transform_3, window_bounds = array<i64: 1, 64, 8>}, {transform_indices = @transform_4, window_bounds = array<i64: 1, 2, 8>}]} {
    %c0 = arith.constant 0 : index
    %c0_0 = arith.constant 0 : index
    %0 = vector.load %arg2[%c0, %c0_0] : memref<2x8xf32, #tpu.memory_space<vmem>>, vector<1x8xf32>
    %c1 = arith.constant 1 : index
    %c0_1 = arith.constant 0 : index
    %1 = vector.load %arg2[%c1, %c0_1] : memref<2x8xf32, #tpu.memory_space<vmem>>, vector<1x8xf32>
    %c0_2 = arith.constant 0 : index
    %c0_3 = arith.constant 0 : index
    %c0_4 = arith.constant 0 : index
    %2 = vector.load %arg1[%c0_2, %c0_3, %c0_4] : memref<1x64x8xf32, #tpu.memory_space<vmem>>, vector<1x64x8xf32>
    %3 = vector.shape_cast %2 : vector<1x64x8xf32> to vector<64x8xf32>
    %4 = vector.broadcast %0 : vector<1x8xf32> to vector<64x8xf32>
    %5 = arith.mulf %3, %4 : vector<64x8xf32>
    %6 = vector.broadcast %1 : vector<1x8xf32> to vector<64x8xf32>
    %7 = arith.addf %5, %6 : vector<64x8xf32>
    %cst = arith.constant 0.000000e+00 : f32
    %8 = vector.broadcast %cst : f32 to vector<64x8xf32>
    %9 = arith.maximumf %7, %8 : vector<64x8xf32>
    %10 = vector.shape_cast %9 : vector<64x8xf32> to vector<8x8x8xf32>
    %cst_5 = arith.constant 0.000000e+00 : f32
    %11 = vector.broadcast %cst_5 : f32 to vector<1x10x8xf32>
    %cst_6 = arith.constant 0.000000e+00 : f32
    %12 = vector.broadcast %cst_6 : f32 to vector<8x1x8xf32>
    %c0_7 = arith.constant 0 : index
    %c0_8 = arith.constant 0 : index
    %c0_9 = arith.constant 0 : index
    %13 = vector.load %arg6[%c0_7, %c0_8, %c0_9] : memref<10x10x8xf32, #tpu.memory_space<vmem>>, vector<1x10x8xf32>
    tpu.vector_store %arg6[%c0_7, %c0_8, %c0_9], %11 {strides = array<i32>} : memref<10x10x8xf32, #tpu.memory_space<vmem>>, vector<1x10x8xf32>,
    %c9 = arith.constant 9 : index
    %c0_10 = arith.constant 0 : index
    %c0_11 = arith.constant 0 : index
    %14 = vector.load %arg6[%c9, %c0_10, %c0_11] : memref<10x10x8xf32, #tpu.memory_space<vmem>>, vector<1x10x8xf32>
    tpu.vector_store %arg6[%c9, %c0_10, %c0_11], %11 {strides = array<i32>} : memref<10x10x8xf32, #tpu.memory_space<vmem>>, vector<1x10x8xf32>,
    %c1_12 = arith.constant 1 : index
    %c0_13 = arith.constant 0 : index
    %c0_14 = arith.constant 0 : index
    %15 = vector.load %arg6[%c1_12, %c0_13, %c0_14] : memref<10x10x8xf32, #tpu.memory_space<vmem>>, vector<8x1x8xf32>
    tpu.vector_store %arg6[%c1_12, %c0_13, %c0_14], %12 {strides = array<i32>} : memref<10x10x8xf32, #tpu.memory_space<vmem>>, vector<8x1x8xf32>,
    %c1_15 = arith.constant 1 : index
    %c9_16 = arith.constant 9 : index
    %c0_17 = arith.constant 0 : index
    %16 = vector.load %arg6[%c1_15, %c9_16, %c0_17] : memref<10x10x8xf32, #tpu.memory_space<vmem>>, vector<8x1x8xf32>
    tpu.vector_store %arg6[%c1_15, %c9_16, %c0_17], %12 {strides = array<i32>} : memref<10x10x8xf32, #tpu.memory_space<vmem>>, vector<8x1x8xf32>,
    %c1_18 = arith.constant 1 : index
    %c1_19 = arith.constant 1 : index
    %c0_20 = arith.constant 0 : index
    %17 = vector.load %arg6[%c1_18, %c1_19, %c0_20] : memref<10x10x8xf32, #tpu.memory_space<vmem>>, vector<8x8x8xf32>
    tpu.vector_store %arg6[%c1_18, %c1_19, %c0_20], %10 {strides = array<i32>} : memref<10x10x8xf32, #tpu.memory_space<vmem>>, vector<8x8x8xf32>,
    %c0_21 = arith.constant 0 : index
    %c0_22 = arith.constant 0 : index
    %c0_23 = arith.constant 0 : index
    %18 = vector.load %arg6[%c0_21, %c0_22, %c0_23] : memref<10x10x8xf32, #tpu.memory_space<vmem>>, vector<8x8x8xf32>
    %19 = vector.shape_cast %18 : vector<8x8x8xf32> to vector<64x8xf32>
    %c0_24 = arith.constant 0 : index
    %c0_25 = arith.constant 0 : index
    %20 = vector.load %arg7[%c0_24, %c0_25] : memref<64x72xf32, #tpu.memory_space<vmem>>, vector<64x8xf32>
    tpu.vector_store %arg7[%c0_24, %c0_25], %19 {strides = array<i32>} : memref<64x72xf32, #tpu.memory_space<vmem>>, vector<64x8xf32>,
    %c0_26 = arith.constant 0 : index
    %c1_27 = arith.constant 1 : index
    %c0_28 = arith.constant 0 : index
    %21 = vector.load %arg6[%c0_26, %c1_27, %c0_28] : memref<10x10x8xf32, #tpu.memory_space<vmem>>, vector<8x8x8xf32>
    %22 = vector.shape_cast %21 : vector<8x8x8xf32> to vector<64x8xf32>
    %c0_29 = arith.constant 0 : index
    %c8 = arith.constant 8 : index
    %23 = vector.load %arg7[%c0_29, %c8] : memref<64x72xf32, #tpu.memory_space<vmem>>, vector<64x8xf32>
    tpu.vector_store %arg7[%c0_29, %c8], %22 {strides = array<i32>} : memref<64x72xf32, #tpu.memory_space<vmem>>, vector<64x8xf32>,
    %c0_30 = arith.constant 0 : index
    %c2 = arith.constant 2 : index
    %c0_31 = arith.constant 0 : index
    %24 = vector.load %arg6[%c0_30, %c2, %c0_31] : memref<10x10x8xf32, #tpu.memory_space<vmem>>, vector<8x8x8xf32>
    %25 = vector.shape_cast %24 : vector<8x8x8xf32> to vector<64x8xf32>
    %c0_32 = arith.constant 0 : index
    %c16 = arith.constant 16 : index
    %26 = vector.load %arg7[%c0_32, %c16] : memref<64x72xf32, #tpu.memory_space<vmem>>, vector<64x8xf32>
    tpu.vector_store %arg7[%c0_32, %c16], %25 {strides = array<i32>} : memref<64x72xf32, #tpu.memory_space<vmem>>, vector<64x8xf32>,
    %c1_33 = arith.constant 1 : index
    %c0_34 = arith.constant 0 : index
    %c0_35 = arith.constant 0 : index
    %27 = vector.load %arg6[%c1_33, %c0_34, %c0_35] : memref<10x10x8xf32, #tpu.memory_space<vmem>>, vector<8x8x8xf32>
    %28 = vector.shape_cast %27 : vector<8x8x8xf32> to vector<64x8xf32>
    %c0_36 = arith.constant 0 : index
    %c24 = arith.constant 24 : index
    %29 = vector.load %arg7[%c0_36, %c24] : memref<64x72xf32, #tpu.memory_space<vmem>>, vector<64x8xf32>
    tpu.vector_store %arg7[%c0_36, %c24], %28 {strides = array<i32>} : memref<64x72xf32, #tpu.memory_space<vmem>>, vector<64x8xf32>,
    %c1_37 = arith.constant 1 : index
    %c1_38 = arith.constant 1 : index
    %c0_39 = arith.constant 0 : index
    %30 = vector.load %arg6[%c1_37, %c1_38, %c0_39] : memref<10x10x8xf32, #tpu.memory_space<vmem>>, vector<8x8x8xf32>
    %31 = vector.shape_cast %30 : vector<8x8x8xf32> to vector<64x8xf32>
    %c0_40 = arith.constant 0 : index
    %c32 = arith.constant 32 : index
    %32 = vector.load %arg7[%c0_40, %c32] : memref<64x72xf32, #tpu.memory_space<vmem>>, vector<64x8xf32>
    tpu.vector_store %arg7[%c0_40, %c32], %31 {strides = array<i32>} : memref<64x72xf32, #tpu.memory_space<vmem>>, vector<64x8xf32>,
    %c1_41 = arith.constant 1 : index
    %c2_42 = arith.constant 2 : index
    %c0_43 = arith.constant 0 : index
    %33 = vector.load %arg6[%c1_41, %c2_42, %c0_43] : memref<10x10x8xf32, #tpu.memory_space<vmem>>, vector<8x8x8xf32>
    %34 = vector.shape_cast %33 : vector<8x8x8xf32> to vector<64x8xf32>
    %c0_44 = arith.constant 0 : index
    %c40 = arith.constant 40 : index
    %35 = vector.load %arg7[%c0_44, %c40] : memref<64x72xf32, #tpu.memory_space<vmem>>, vector<64x8xf32>
    tpu.vector_store %arg7[%c0_44, %c40], %34 {strides = array<i32>} : memref<64x72xf32, #tpu.memory_space<vmem>>, vector<64x8xf32>,
    %c2_45 = arith.constant 2 : index
    %c0_46 = arith.constant 0 : index
    %c0_47 = arith.constant 0 : index
    %36 = vector.load %arg6[%c2_45, %c0_46, %c0_47] : memref<10x10x8xf32, #tpu.memory_space<vmem>>, vector<8x8x8xf32>
    %37 = vector.shape_cast %36 : vector<8x8x8xf32> to vector<64x8xf32>
    %c0_48 = arith.constant 0 : index
    %c48 = arith.constant 48 : index
    %38 = vector.load %arg7[%c0_48, %c48] : memref<64x72xf32, #tpu.memory_space<vmem>>, vector<64x8xf32>
    tpu.vector_store %arg7[%c0_48, %c48], %37 {strides = array<i32>} : memref<64x72xf32, #tpu.memory_space<vmem>>, vector<64x8xf32>,
    %c2_49 = arith.constant 2 : index
    %c1_50 = arith.constant 1 : index
    %c0_51 = arith.constant 0 : index
    %39 = vector.load %arg6[%c2_49, %c1_50, %c0_51] : memref<10x10x8xf32, #tpu.memory_space<vmem>>, vector<8x8x8xf32>
    %40 = vector.shape_cast %39 : vector<8x8x8xf32> to vector<64x8xf32>
    %c0_52 = arith.constant 0 : index
    %c56 = arith.constant 56 : index
    %41 = vector.load %arg7[%c0_52, %c56] : memref<64x72xf32, #tpu.memory_space<vmem>>, vector<64x8xf32>
    tpu.vector_store %arg7[%c0_52, %c56], %40 {strides = array<i32>} : memref<64x72xf32, #tpu.memory_space<vmem>>, vector<64x8xf32>,
    %c2_53 = arith.constant 2 : index
    %c2_54 = arith.constant 2 : index
    %c0_55 = arith.constant 0 : index
    %42 = vector.load %arg6[%c2_53, %c2_54, %c0_55] : memref<10x10x8xf32, #tpu.memory_space<vmem>>, vector<8x8x8xf32>
    %43 = vector.shape_cast %42 : vector<8x8x8xf32> to vector<64x8xf32>
    %c0_56 = arith.constant 0 : index
    %c64 = arith.constant 64 : index
    %44 = vector.load %arg7[%c0_56, %c64] : memref<64x72xf32, #tpu.memory_space<vmem>>, vector<64x8xf32>
    tpu.vector_store %arg7[%c0_56, %c64], %43 {strides = array<i32>} : memref<64x72xf32, #tpu.memory_space<vmem>>, vector<64x8xf32>,
    %c0_57 = arith.constant 0 : index
    %c0_58 = arith.constant 0 : index
    %45 = vector.load %arg7[%c0_57, %c0_58] : memref<64x72xf32, #tpu.memory_space<vmem>>, vector<64x72xf32>
    %c0_59 = arith.constant 0 : index
    %c0_60 = arith.constant 0 : index
    %46 = vector.load %arg3[%c0_59, %c0_60] : memref<72x8xf32, #tpu.memory_space<vmem>>, vector<72x8xf32>
    %cst_61 = arith.constant dense<0.000000e+00> : vector<64x8xf32>
    %47 = tpu.matmul %45, %46, %cst_61 {dimension_numbers = #tpu.dot_dimension_numbers<[1], [0], [0], [1], [0, 0, 1, 1], [], []>} : vector<64x72xf32>, vector<72x8xf32>, vector<64x8xf32> -> vector<64x8xf32>
    %cst_62 = arith.constant dense<0.000000e+00> : vector<8xf32>
    %48 = vector.multi_reduction <add>, %47, %cst_62 [0] : vector<64x8xf32> to vector<8xf32>
    %49 = vector.shape_cast %48 : vector<8xf32> to vector<1x8xf32>
    %c0_63 = arith.constant 0 : index
    %c0_64 = arith.constant 0 : index
    %c0_65 = arith.constant 0 : index
    %50 = vector.load %arg5[%c0_63, %c0_64, %c0_65] : memref<1x2x8xf32, #tpu.memory_space<vmem>>, vector<1x1x8xf32>
    %51 = vector.shape_cast %50 : vector<1x1x8xf32> to vector<1x8xf32>
    %52 = vector.shape_cast %49 : vector<1x8xf32> to vector<1x1x8xf32>
    tpu.vector_store %arg5[%c0_63, %c0_64, %c0_65], %52 {strides = array<i32>} : memref<1x2x8xf32, #tpu.memory_space<vmem>>, vector<1x1x8xf32>,
    %53 = arith.mulf %47, %47 : vector<64x8xf32>
    %cst_66 = arith.constant dense<0.000000e+00> : vector<8xf32>
    %54 = vector.multi_reduction <add>, %53, %cst_66 [0] : vector<64x8xf32> to vector<8xf32>
    %55 = vector.shape_cast %54 : vector<8xf32> to vector<1x8xf32>
    %c0_67 = arith.constant 0 : index
    %c1_68 = arith.constant 1 : index
    %c0_69 = arith.constant 0 : index
    %56 = vector.load %arg5[%c0_67, %c1_68, %c0_69] : memref<1x2x8xf32, #tpu.memory_space<vmem>>, vector<1x1x8xf32>
    %57 = vector.shape_cast %56 : vector<1x1x8xf32> to vector<1x8xf32>
    %58 = vector.shape_cast %55 : vector<1x8xf32> to vector<1x1x8xf32>
    tpu.vector_store %arg5[%c0_67, %c1_68, %c0_69], %58 {strides = array<i32>} : memref<1x2x8xf32, #tpu.memory_space<vmem>>, vector<1x1x8xf32>,
    %c0_70 = arith.constant 0 : index
    %c0_71 = arith.constant 0 : index
    %c0_72 = arith.constant 0 : index
    %59 = vector.load %arg4[%c0_70, %c0_71, %c0_72] : memref<1x64x8xf32, #tpu.memory_space<vmem>>, vector<1x64x8xf32>
    %60 = vector.shape_cast %59 : vector<1x64x8xf32> to vector<64x8xf32>
    %61 = vector.shape_cast %47 : vector<64x8xf32> to vector<1x64x8xf32>
    tpu.vector_store %arg4[%c0_70, %c0_71, %c0_72], %61 {strides = array<i32>} : memref<1x64x8xf32, #tpu.memory_space<vmem>>, vector<1x64x8xf32>,
    return
  }
  func.func @transform_0(%arg0: i32) -> (i32, i32, i32) {
    %c0_i32 = arith.constant 0 : i32
    %c0_i32_0 = arith.constant 0 : i32
    %c0_i32_1 = arith.constant 0 : i32
    return %arg0, %c0_i32, %c0_i32_0 : i32, i32, i32
  }
  func.func @transform_1(%arg0: i32) -> (i32, i32) {
    %c0_i32 = arith.constant 0 : i32
    %c0_i32_0 = arith.constant 0 : i32
    %c0_i32_1 = arith.constant 0 : i32
    return %c0_i32, %c0_i32_0 : i32, i32
  }
  func.func @transform_2(%arg0: i32) -> (i32, i32) {
    %c0_i32 = arith.constant 0 : i32
    %c0_i32_0 = arith.constant 0 : i32
    %c0_i32_1 = arith.constant 0 : i32
    return %c0_i32, %c0_i32_0 : i32, i32
  }
  func.func @transform_3(%arg0: i32) -> (i32, i32, i32) {
    %c0_i32 = arith.constant 0 : i32
    %c0_i32_0 = arith.constant 0 : i32
    %c0_i32_1 = arith.constant 0 : i32
    return %arg0, %c0_i32, %c0_i32_0 : i32, i32, i32
  }
  func.func @transform_4(%arg0: i32) -> (i32, i32, i32) {
    %c0_i32 = arith.constant 0 : i32
    %c0_i32_0 = arith.constant 0 : i32
    %c0_i32_1 = arith.constant 0 : i32
    return %arg0, %c0_i32, %c0_i32_0 : i32, i32, i32
  }
}

</mosaic_0001>

<llo_original>
// kernel: down_forward.5
$region0: #{down_forward.5}
  #allocation0 [shape = 'u32[]', space=smem, size = 0x4, offset = 0x4, fixed_abs, tag = 'smem constant byte address 0x4 - core index']
  #allocation1 [shape = 'u32[72,128]{1,0:T(1,128)}', space=vmem, size = 0x9000, scoped, tag = 'internal scratch']
  %s0 = inlined_call_operand.vmem [shape: f32[2,64,8], index: 0, kind: input, shape index: {}]
  %s1 = inlined_call_operand.vmem [shape: f32[2,8], index: 1, kind: input, shape index: {}]
  %s2 = inlined_call_operand.vmem [shape: f32[2,8,64], index: 2, kind: output, shape index: {}]
  %s3 = sld [smem:[#allocation0]]
  $region41: #{down_forward.5} parent=0
    _
  %s5 = ssub.s32 1, %s3
  %s6 = scalar_select 0, %s5, %s3
  loop: start=0, step=1, limit=4
  $region2: #{down_forward.5} parent=0 // loop_pre_header
    _
  $region3: #{down_forward.5} parent=0 // loop_header
    %s8 = sphi 0, %s12
    %p9 = scmp.ge.s32.totalorder %s8, 4
    %s18 = sphi 0, %s20
    %s21 = sphi 0, %s18
    %s22 = sphi 0, %s21
    %s38 = sphi 0, %s22
    %s42 = sphi 0, %s42
    %s44 = sphi 0, %s42
    %s45 = sphi 0, %s44
    %s59 = sphi 0, %s45
    %s65 = sphi 0, %s67
    %s68 = sphi 0, %s65
    %s69 = sphi 0, %s68
    %s85 = sphi 0, %s69
  $region4: #{down_forward.5} parent=0 // loop_header_branch
    %11 = sbr.rel (%p9) target = $region8
  $region5: #{down_forward.5} parent=0 // loop_body
    %s13 = ssub.s32 %s8, 1
    %s14 = ssub.s32 %s8, 2
    %s15 = sadd.s32 %s8, 1
    %s16 = ssub.s32 %s8, %s15
    %p17 = scmp.eq.s32.totalorder %s16, 0
    %s19 = sadd.s32 %s18, 1
    %s20 = scalar_select %p17, %s18, %s19
    %p23 = pneg %p17
    %p24 = scmp.eq.s32.totalorder %s8, 1
    %p25 = por %p23, %p24
    %p26 = scmp.ne.s32.totalorder %s18, %s21
    %p27 = scmp.eq.s32.totalorder %s8, 0
    %p28 = por %p26, %p27
    %p29 = scmp.ne.s32.totalorder %s18, %s21
    %p30 = scmp.eq.s32.totalorder %s13, 1
    %p31 = por %p29, %p30
    %p32 = scmp.ne.s32.totalorder %s21, %s22
    %p33 = scmp.eq.s32.totalorder %s13, 0
    %p34 = por %p32, %p33
    %p35 = scmp.ne.s32.totalorder %s21, %s22
    %p36 = scmp.eq.s32.totalorder %s14, 1
    %p37 = por %p35, %p36
    %p39 = scmp.ne.s32.totalorder %s22, %s38
    %p40 = scmp.eq.s32.totalorder %s14, 0
    %p41 = por %p39, %p40
    %s43 = sadd.s32 %s42, 1
    %p46 = scmp.eq.s32.totalorder %s8, 1
    %p47 = scmp.ne.s32.totalorder %s42, %s44
    %p48 = scmp.eq.s32.totalorder %s8, 0
    %p49 = por %p47, %p48
    %p50 = scmp.ne.s32.totalorder %s42, %s44
    %p51 = scmp.eq.s32.totalorder %s13, 1
    %p52 = por %p50, %p51
    %p53 = scmp.ne.s32.totalorder %s44, %s45
    %p54 = scmp.eq.s32.totalorder %s13, 0
    %p55 = por %p53, %p54
    %p56 = scmp.ne.s32.totalorder %s44, %s45
    %p57 = scmp.eq.s32.totalorder %s14, 1
    %p58 = por %p56, %p57
    %p60 = scmp.ne.s32.totalorder %s45, %s59
    %p61 = scmp.eq.s32.totalorder %s14, 0
    %p62 = por %p60, %p61
    %s63 = ssub.s32 %s8, %s15
    %p64 = scmp.eq.s32.totalorder %s63, 0
    %s66 = sadd.s32 %s65, 1
    %s67 = scalar_select %p64, %s65, %s66
    %p70 = pneg %p64
    %p71 = scmp.eq.s32.totalorder %s8, 1
    %p72 = por %p70, %p71
    %p73 = scmp.ne.s32.totalorder %s65, %s68
    %p74 = scmp.eq.s32.totalorder %s8, 0
    %p75 = por %p73, %p74
    %p76 = scmp.ne.s32.totalorder %s65, %s68
    %p77 = scmp.eq.s32.totalorder %s13, 1
    %p78 = por %p76, %p77
    %p79 = scmp.ne.s32.totalorder %s68, %s69
    %p80 = scmp.eq.s32.totalorder %s13, 0
    %p81 = por %p79, %p80
    %p82 = scmp.ne.s32.totalorder %s68, %s69
    %p83 = scmp.eq.s32.totalorder %s14, 1
    %p84 = por %p82, %p83
    %p86 = scmp.ne.s32.totalorder %s69, %s85
    %p87 = scmp.eq.s32.totalorder %s14, 0
    %p88 = por %p86, %p87
    %p89 = scmp.le.s32.totalorder 1, %s8
    %p90 = scmp.lt.s32.totalorder %s8, 3
    %p91 = pnand %p89, %p90
    %p92 = pneg %p91
    // Predicated region
    $region9: #{down_forward.5} parent=5 // pred_check
      _
    $region10: #{down_forward.5} parent=5 // pred_check_branch
      %94 = sbr.rel (%p91) target = $region12
    $region11: #{down_forward.5} parent=5 // pred_region
      %s95 = ssub.s32 %s8, 1
      // Predicated region
      $region13: #{down_forward.5} parent=11 // pred_check
        %p96 = pneg %p55
      $region14: #{down_forward.5} parent=11 // pred_check_branch
        %98 = sbr.rel (%p96) target = $region16
      $region15: #{down_forward.5} parent=11 // pred_region
        _
      $region16: #{down_forward.5} parent=11 // pred_fallthru
        _
    $region12: #{down_forward.5} parent=5 // pred_fallthru
      _
    %p99 = scmp.lt.s32.totalorder %s8, 2
    // Predicated region
    $region17: #{down_forward.5} parent=5 // pred_check
      %p100 = pneg %p99
    $region18: #{down_forward.5} parent=5 // pred_check_branch
      %102 = sbr.rel (%p100) target = $region20
    $region19: #{down_forward.5} parent=5 // pred_region
      // Predicated region
      $region21: #{down_forward.5} parent=19 // pred_check
        %p103 = pneg %p28
      $region22: #{down_forward.5} parent=19 // pred_check_branch
        %105 = sbr.rel (%p103) target = $region24
      $region23: #{down_forward.5} parent=19 // pred_region
        %p106 = scmp.lt.s32.totalorder %s8, 1
        %s107 = scalar_select %p106, %s8, 1
        %s108 = smul.addr %s107, 8
        %s109 = smul.addr %s108, 8
        %s110 = scalar_lea.vmem %s0, %s109
      $region24: #{down_forward.5} parent=19 // pred_fallthru
        _
    $region20: #{down_forward.5} parent=5 // pred_fallthru
      _
    %p111 = scmp.le.s32.totalorder 1, %s8
    %p112 = scmp.lt.s32.totalorder %s8, 3
    %p113 = pnand %p111, %p112
    %p114 = pneg %p113
    // Predicated region
    $region25: #{down_forward.5} parent=5 // pred_check
      _
    $region26: #{down_forward.5} parent=5 // pred_check_branch
      %116 = sbr.rel (%p113) target = $region28
    $region27: #{down_forward.5} parent=5 // pred_region
      %s117 = ssub.s32 %s8, 1
      %p118 = scmp.lt.s32.totalorder %s13, 1
      %s119 = scalar_select %p118, %s13, 1
      %s120 = smul.addr %s119, 8
      %s121 = smul.addr %s120, 8
      %s122 = scalar_lea.vmem %s0, %s121
      %p123 = pneg %p34
      %p124 = pneg %p31
      %p125 = pneg %p55
      %p126 = pneg %p52
      %p127 = pneg %p81
      %p128 = pneg %p78
      %p129 = scmp.lt.s32.totalorder %s13, 1
      %s130 = scalar_select %p129, %s13, 1
      %s131 = smul.addr %s130, 8
      %s132 = scalar_lea.vmem %s2, %s131
      %p133 = scmp.lt.s32.totalorder %s13, 1
      %s134 = scalar_select %p133, %s13, 1
      %s135 = smul.addr %s134, 8
      %s136 = smul.addr %s135, 8
      %s137 = scalar_lea.vmem %s0, %s136
      %p138 = scmp.lt.s32.totalorder %s13, 1
      %s139 = scalar_select %p138, %s13, 1
      %s140 = smul.addr %s139, 8
      %s141 = scalar_lea.vmem %s2, %s140
      %v142 = vld [vmem:[%s1] sm:$0x1]
      %v143 = vld [vmem:[%s1 + $0x1] sm:$0x1]
      %v144 = vld [vmem:[%s137] sm:$0xff]
      %v145 = vld [vmem:[%s137 + $0x8] sm:$0xff]
      %v146 = vld [vmem:[%s137 + $0x10] sm:$0xff]
      %v147 = vld [vmem:[%s137 + $0x18] sm:$0xff]
      %v148 = vld [vmem:[%s137 + $0x20] sm:$0xff]
      %v149 = vld [vmem:[%s137 + $0x28] sm:$0xff]
      %v150 = vld [vmem:[%s137 + $0x30] sm:$0xff]
      %v151 = vld [vmem:[%s137 + $0x38] sm:$0xff]
      %v152 = vperm.slane %v142, 0
      %v153 = vmul.f32 %v144, %v152
      %v154 = vmul.f32 %v145, %v152
      %v155 = vmul.f32 %v146, %v152
      %v156 = vmul.f32 %v147, %v152
      %v157 = vmul.f32 %v148, %v152
      %v158 = vmul.f32 %v149, %v152
      %v159 = vmul.f32 %v150, %v152
      %v160 = vmul.f32 %v151, %v152
      %v161 = vperm.slane %v143, 0
      %v162 = vadd.f32 %v153, %v161
      %v163 = vadd.f32 %v154, %v161
      %v164 = vadd.f32 %v155, %v161
      %v165 = vadd.f32 %v156, %v161
      %v166 = vadd.f32 %v157, %v161
      %v167 = vadd.f32 %v158, %v161
      %v168 = vadd.f32 %v159, %v161
      %v169 = vadd.f32 %v160, %v161
      %v170 = vmax.f32 %v162, 0.0
      %v171 = vmax.f32 %v163, 0.0
      %v172 = vmax.f32 %v164, 0.0
      %v173 = vmax.f32 %v165, 0.0
      %v174 = vmax.f32 %v166, 0.0
      %v175 = vmax.f32 %v167, 0.0
      %v176 = vmax.f32 %v168, 0.0
      %v177 = vmax.f32 %v169, 0.0
      %178 = vxpose.xlu0.b32.start [1/16] %v170, 128
      %179 = vxpose.xlu0.b32.cont [2/16] %v171, 128
      %180 = vxpose.xlu0.b32.cont [3/16] %v172, 128
      %181 = vxpose.xlu0.b32.cont [4/16] %v173, 128
      %182 = vxpose.xlu0.b32.cont [5/16] %v174, 128
      %183 = vxpose.xlu0.b32.cont [6/16] %v175, 128
      %184 = vxpose.xlu0.b32.cont [7/16] %v176, 128
      %185 = vxpose.xlu0.b32.cont [8/16] %v177, 128
      %186 = vxpose.xlu0.b32.cont [9/16] 0.0, 128
      %187 = vxpose.xlu0.b32.cont [10/16] 0.0, 128
      %188 = vxpose.xlu0.b32.cont [11/16] 0.0, 128
      %189 = vxpose.xlu0.b32.cont [12/16] 0.0, 128
      %190 = vxpose.xlu0.b32.cont [13/16] 0.0, 128
      %191 = vxpose.xlu0.b32.cont [14/16] 0.0, 128
      %192 = vxpose.xlu0.b32.cont [15/16] 0.0, 128
      %193 = vxpose.xlu0.b32.end [16/16] 0.0, 128
      %v194 = vpop.trf.xlu0
      %v195 = vpop.trf.xlu0
      %v196 = vpop.trf.xlu0
      %v197 = vpop.trf.xlu0
      %v198 = vpop.trf.xlu0
      %v199 = vpop.trf.xlu0
      %v200 = vpop.trf.xlu0
      %v201 = vpop.trf.xlu0
      %v202 = vpop.trf.xlu0
      %v203 = vpop.trf.xlu0
      %v204 = vpop.trf.xlu0
      %v205 = vpop.trf.xlu0
      %v206 = vpop.trf.xlu0
      %v207 = vpop.trf.xlu0
      %v208 = vpop.trf.xlu0
      %v209 = vpop.trf.xlu0
      %vm210 = vcmask 523264
      %211 = vst.msk [vmem:[%s141] sm:$0xff] %vm210, %v194
      %p212 = scmp.lt.s32.totalorder %s13, 1
      %s213 = scalar_select %p212, %s13, 1
      %s214 = smul.addr %s213, 8
      %s215 = scalar_lea.vmem %s2, %s214
      // Predicated region
      $region29: #{down_forward.5} parent=27 // pred_check
        %p216 = pneg %p78
      $region30: #{down_forward.5} parent=27 // pred_check_branch
        %218 = sbr.rel (%p216) target = $region32
      $region31: #{down_forward.5} parent=27 // pred_region
        _
      $region32: #{down_forward.5} parent=27 // pred_fallthru
        _
    $region28: #{down_forward.5} parent=5 // pred_fallthru
      _
    %p219 = scmp.le.s32.totalorder 2, %s8
    // Predicated region
    $region33: #{down_forward.5} parent=5 // pred_check
      %p220 = pneg %p219
    $region34: #{down_forward.5} parent=5 // pred_check_branch
      %222 = sbr.rel (%p220) target = $region36
    $region35: #{down_forward.5} parent=5 // pred_region
      %s223 = ssub.s32 %s8, 2
      // Predicated region
      $region37: #{down_forward.5} parent=35 // pred_check
        %p224 = pneg %p84
      $region38: #{down_forward.5} parent=35 // pred_check_branch
        %226 = sbr.rel (%p224) target = $region40
      $region39: #{down_forward.5} parent=35 // pred_region
        %p227 = scmp.lt.s32.totalorder %s14, 1
        %s228 = scalar_select %p227, %s14, 1
        %s229 = smul.addr %s228, 8
        %s230 = scalar_lea.vmem %s2, %s229
      $region40: #{down_forward.5} parent=35 // pred_fallthru
        _
    $region36: #{down_forward.5} parent=5 // pred_fallthru
      _
  $region6: #{down_forward.5} parent=0 // loop_footer
    %s12 = sadd.s32 1, %s8
  $region7: #{down_forward.5} parent=0 // loop_footer_branch
    %7 = sbr.rel target = $region3
  $region8: #{down_forward.5} parent=0 // loop_exit
    _

// kernel: down_forward.3
$region0: #{down_forward.3}
  #allocation0 [shape = 'u32[]', space=smem, size = 0x4, offset = 0x4, fixed_abs, tag = 'smem constant byte address 0x4 - core index']
  #allocation1 [shape = 'u32[72,128]{1,0:T(1,128)}', space=vmem, size = 0x9000, scoped, tag = 'internal scratch']
  #allocation2 [shape = 'f32[10,10,4]{2,1,0:T(8,128)}', space=vmem, size = 0x14000, scoped, tag = 'scratch operand']
  #allocation3 [shape = 'f32[64,36]{1,0:T(8,128)}', space=vmem, size = 0x8000, scoped, tag = 'scratch operand']
  %s0 = inlined_call_operand.vmem [shape: f32[2,16,16,4], index: 0, kind: input, shape index: {}]
  %s1 = inlined_call_operand.vmem [shape: f32[36,8], index: 1, kind: input, shape index: {}]
  %s2 = inlined_call_operand.vmem [shape: f32[2,64,8], index: 2, kind: output, shape index: {0}]
  %s3 = inlined_call_operand.vmem [shape: f32[2,2,8], index: 3, kind: output, shape index: {1}]
  %4 = xla_tuple %s2, %s3
  %s5 = sld [smem:[#allocation0]]
  $region49: #{down_forward.3} parent=0
    _
  %s7 = ssub.s32 1, %s5
  %s8 = scalar_select 0, %s7, %s5
  loop: start=0, step=1, limit=4
  $region2: #{down_forward.3} parent=0 // loop_pre_header
    _
  $region3: #{down_forward.3} parent=0 // loop_header
    %s10 = sphi 0, %s14
    %p11 = scmp.ge.s32.totalorder %s10, 4
    %s20 = sphi 0, %s22
    %s23 = sphi 0, %s20
    %s24 = sphi 0, %s23
    %s40 = sphi 0, %s24
    %s44 = sphi 0, %s44
    %s46 = sphi 0, %s44
    %s47 = sphi 0, %s46
    %s61 = sphi 0, %s47
    %s67 = sphi 0, %s69
    %s70 = sphi 0, %s67
    %s71 = sphi 0, %s70
    %s87 = sphi 0, %s71
    %s93 = sphi 0, %s95
    %s96 = sphi 0, %s93
    %s97 = sphi 0, %s96
    %s113 = sphi 0, %s97
  $region4: #{down_forward.3} parent=0 // loop_header_branch
    %13 = sbr.rel (%p11) target = $region8
  $region5: #{down_forward.3} parent=0 // loop_body
    %s15 = ssub.s32 %s10, 1
    %s16 = ssub.s32 %s10, 2
    %s17 = sadd.s32 %s10, 1
    %s18 = ssub.s32 %s10, %s17
    %p19 = scmp.eq.s32.totalorder %s18, 0
    %s21 = sadd.s32 %s20, 1
    %s22 = scalar_select %p19, %s20, %s21
    %p25 = pneg %p19
    %p26 = scmp.eq.s32.totalorder %s10, 1
    %p27 = por %p25, %p26
    %p28 = scmp.ne.s32.totalorder %s20, %s23
    %p29 = scmp.eq.s32.totalorder %s10, 0
    %p30 = por %p28, %p29
    %p31 = scmp.ne.s32.totalorder %s20, %s23
    %p32 = scmp.eq.s32.totalorder %s15, 1
    %p33 = por %p31, %p32
    %p34 = scmp.ne.s32.totalorder %s23, %s24
    %p35 = scmp.eq.s32.totalorder %s15, 0
    %p36 = por %p34, %p35
    %p37 = scmp.ne.s32.totalorder %s23, %s24
    %p38 = scmp.eq.s32.totalorder %s16, 1
    %p39 = por %p37, %p38
    %p41 = scmp.ne.s32.totalorder %s24, %s40
    %p42 = scmp.eq.s32.totalorder %s16, 0
    %p43 = por %p41, %p42
    %s45 = sadd.s32 %s44, 1
    %p48 = scmp.eq.s32.totalorder %s10, 1
    %p49 = scmp.ne.s32.totalorder %s44, %s46
    %p50 = scmp.eq.s32.totalorder %s10, 0
    %p51 = por %p49, %p50
    %p52 = scmp.ne.s32.totalorder %s44, %s46
    %p53 = scmp.eq.s32.totalorder %s15, 1
    %p54 = por %p52, %p53
    %p55 = scmp.ne.s32.totalorder %s46, %s47
    %p56 = scmp.eq.s32.totalorder %s15, 0
    %p57 = por %p55, %p56
    %p58 = scmp.ne.s32.totalorder %s46, %s47
    %p59 = scmp.eq.s32.totalorder %s16, 1
    %p60 = por %p58, %p59
    %p62 = scmp.ne.s32.totalorder %s47, %s61
    %p63 = scmp.eq.s32.totalorder %s16, 0
    %p64 = por %p62, %p63
    %s65 = ssub.s32 %s10, %s17
    %p66 = scmp.eq.s32.totalorder %s65, 0
    %s68 = sadd.s32 %s67, 1
    %s69 = scalar_select %p66, %s67, %s68
    %p72 = pneg %p66
    %p73 = scmp.eq.s32.totalorder %s10, 1
    %p74 = por %p72, %p73
    %p75 = scmp.ne.s32.totalorder %s67, %s70
    %p76 = scmp.eq.s32.totalorder %s10, 0
    %p77 = por %p75, %p76
    %p78 = scmp.ne.s32.totalorder %s67, %s70
    %p79 = scmp.eq.s32.totalorder %s15, 1
    %p80 = por %p78, %p79
    %p81 = scmp.ne.s32.totalorder %s70, %s71
    %p82 = scmp.eq.s32.totalorder %s15, 0
    %p83 = por %p81, %p82
    %p84 = scmp.ne.s32.totalorder %s70, %s71
    %p85 = scmp.eq.s32.totalorder %s16, 1
    %p86 = por %p84, %p85
    %p88 = scmp.ne.s32.totalorder %s71, %s87
    %p89 = scmp.eq.s32.totalorder %s16, 0
    %p90 = por %p88, %p89
    %s91 = ssub.s32 %s10, %s17
    %p92 = scmp.eq.s32.totalorder %s91, 0
    %s94 = sadd.s32 %s93, 1
    %s95 = scalar_select %p92, %s93, %s94
    %p98 = pneg %p92
    %p99 = scmp.eq.s32.totalorder %s10, 1
    %p100 = por %p98, %p99
    %p101 = scmp.ne.s32.totalorder %s93, %s96
    %p102 = scmp.eq.s32.totalorder %s10, 0
    %p103 = por %p101, %p102
    %p104 = scmp.ne.s32.totalorder %s93, %s96
    %p105 = scmp.eq.s32.totalorder %s15, 1
    %p106 = por %p104, %p105
    %p107 = scmp.ne.s32.totalorder %s96, %s97
    %p108 = scmp.eq.s32.totalorder %s15, 0
    %p109 = por %p107, %p108
    %p110 = scmp.ne.s32.totalorder %s96, %s97
    %p111 = scmp.eq.s32.totalorder %s16, 1
    %p112 = por %p110, %p111
    %p114 = scmp.ne.s32.totalorder %s97, %s113
    %p115 = scmp.eq.s32.totalorder %s16, 0
    %p116 = por %p114, %p115
    %p117 = scmp.le.s32.totalorder 1, %s10
    %p118 = scmp.lt.s32.totalorder %s10, 3
    %p119 = pnand %p117, %p118
    %p120 = pneg %p119
    // Predicated region
    $region9: #{down_forward.3} parent=5 // pred_check
      _
    $region10: #{down_forward.3} parent=5 // pred_check_branch
      %122 = sbr.rel (%p119) target = $region12
    $region11: #{down_forward.3} parent=5 // pred_region
      %s123 = ssub.s32 %s10, 1
      // Predicated region
      $region13: #{down_forward.3} parent=11 // pred_check
        %p124 = pneg %p57
      $region14: #{down_forward.3} parent=11 // pred_check_branch
        %126 = sbr.rel (%p124) target = $region16
      $region15: #{down_forward.3} parent=11 // pred_region
        _
      $region16: #{down_forward.3} parent=11 // pred_fallthru
        _
    $region12: #{down_forward.3} parent=5 // pred_fallthru
      _
    %p127 = scmp.lt.s32.totalorder %s10, 2
    // Predicated region
    $region17: #{down_forward.3} parent=5 // pred_check
      %p128 = pneg %p127
    $region18: #{down_forward.3} parent=5 // pred_check_branch
      %130 = sbr.rel (%p128) target = $region20
    $region19: #{down_forward.3} parent=5 // pred_region
      // Predicated region
      $region21: #{down_forward.3} parent=19 // pred_check
        %p131 = pneg %p30
      $region22: #{down_forward.3} parent=19 // pred_check_branch
        %133 = sbr.rel (%p131) target = $region24
      $region23: #{down_forward.3} parent=19 // pred_region
        %p134 = scmp.lt.s32.totalorder %s10, 1
        %s135 = scalar_select %p134, %s10, 1
        %s136 = smul.addr %s135, 32
        %s137 = smul.addr %s136, 8
        %s138 = scalar_lea.vmem %s0, %s137
      $region24: #{down_forward.3} parent=19 // pred_fallthru
        _
    $region20: #{down_forward.3} parent=5 // pred_fallthru
      _
    %p139 = scmp.le.s32.totalorder 1, %s10
    %p140 = scmp.lt.s32.totalorder %s10, 3
    %p141 = pnand %p139, %p140
    %p142 = pneg %p141
    // Predicated region
    $region25: #{down_forward.3} parent=5 // pred_check
      _
    $region26: #{down_forward.3} parent=5 // pred_check_branch
      %144 = sbr.rel (%p141) target = $region28
    $region27: #{down_forward.3} parent=5 // pred_region
      %s145 = ssub.s32 %s10, 1
      %p146 = scmp.lt.s32.totalorder %s15, 1
      %s147 = scalar_select %p146, %s15, 1
      %s148 = smul.addr %s147, 32
      %s149 = smul.addr %s148, 8
      %s150 = scalar_lea.vmem %s0, %s149
      %p151 = pneg %p36
      %p152 = pneg %p33
      %p153 = pneg %p57
      %p154 = pneg %p54
      %p155 = pneg %p83
      %p156 = pneg %p80
      %p157 = scmp.lt.s32.totalorder %s15, 1
      %s158 = scalar_select %p157, %s15, 1
      %s159 = smul.addr %s158, 8
      %s160 = smul.addr %s159, 8
      %s161 = scalar_lea.vmem %s2, %s160
      %p162 = pneg %p109
      %p163 = pneg %p106
      %p164 = scmp.lt.s32.totalorder %s15, 1
      %s165 = scalar_select %p164, %s15, 1
      %s166 = smul.addr %s165, 2
      %s167 = scalar_lea.vmem %s3, %s166
      %p168 = scmp.lt.s32.totalorder %s15, 1
      %s169 = scalar_select %p168, %s15, 1
      %s170 = smul.addr %s169, 32
      %s171 = smul.addr %s170, 8
      %s172 = scalar_lea.vmem %s0, %s171
      %p173 = scmp.lt.s32.totalorder %s15, 1
      %s174 = scalar_select %p173, %s15, 1
      %s175 = smul.addr %s174, 8
      %s176 = smul.addr %s175, 8
      %s177 = scalar_lea.vmem %s2, %s176
      %p178 = scmp.lt.s32.totalorder %s15, 1
      %s179 = scalar_select %p178, %s15, 1
      %s180 = smul.addr %s179, 2
      %s181 = scalar_lea.vmem %s3, %s180
      %v182 = vld [vmem:[%s172] ss:$2 sm:$0xff]
      %s183 = scalar_lea.vmem %s172, 16
      %v184 = vld [vmem:[%s183] ss:$2 sm:$0xff]
      %s185 = scalar_lea.vmem %s172, 32
      %v186 = vld [vmem:[%s185] ss:$2 sm:$0xff]
      %s187 = scalar_lea.vmem %s172, 48
      %v188 = vld [vmem:[%s187] ss:$2 sm:$0xff]
      %s189 = scalar_lea.vmem %s172, 64
      %v190 = vld [vmem:[%s189] ss:$2 sm:$0xff]
      %s191 = scalar_lea.vmem %s172, 80
      %v192 = vld [vmem:[%s191] ss:$2 sm:$0xff]
      %s193 = scalar_lea.vmem %s172, 96
      %v194 = vld [vmem:[%s193] ss:$2 sm:$0xff]
      %s195 = scalar_lea.vmem %s172, 112
      %v196 = vld [vmem:[%s195] ss:$2 sm:$0xff]
      %s197 = scalar_lea.vmem %s172, 128
      %v198 = vld [vmem:[%s197] ss:$2 sm:$0xff]
      %s199 = scalar_lea.vmem %s172, 144
      %v200 = vld [vmem:[%s199] ss:$2 sm:$0xff]
      %s201 = scalar_lea.vmem %s172, 160
      %v202 = vld [vmem:[%s201] ss:$2 sm:$0xff]
      %s203 = scalar_lea.vmem %s172, 176
      %v204 = vld [vmem:[%s203] ss:$2 sm:$0xff]
      %s205 = scalar_lea.vmem %s172, 192
      %v206 = vld [vmem:[%s205] ss:$2 sm:$0xff]
      %s207 = scalar_lea.vmem %s172, 208
      %v208 = vld [vmem:[%s207] ss:$2 sm:$0xff]
      %s209 = scalar_lea.vmem %s172, 224
      %v210 = vld [vmem:[%s209] ss:$2 sm:$0xff]
      %s211 = scalar_lea.vmem %s172, 240
      %v212 = vld [vmem:[%s211] ss:$2 sm:$0xff]
      %s213 = scalar_lea.vmem %s172, 1
      %v214 = vld [vmem:[%s213] ss:$2 sm:$0xff]
      %s215 = scalar_lea.vmem %s172, 17
      %v216 = vld [vmem:[%s215] ss:$2 sm:$0xff]
      %s217 = scalar_lea.vmem %s172, 33
      %v218 = vld [vmem:[%s217] ss:$2 sm:$0xff]
      %s219 = scalar_lea.vmem %s172, 49
      %v220 = vld [vmem:[%s219] ss:$2 sm:$0xff]
      %s221 = scalar_lea.vmem %s172, 65
      %v222 = vld [vmem:[%s221] ss:$2 sm:$0xff]
      %s223 = scalar_lea.vmem %s172, 81
      %v224 = vld [vmem:[%s223] ss:$2 sm:$0xff]
      %s225 = scalar_lea.vmem %s172, 97
      %v226 = vld [vmem:[%s225] ss:$2 sm:$0xff]
      %s227 = scalar_lea.vmem %s172, 113
      %v228 = vld [vmem:[%s227] ss:$2 sm:$0xff]
      %s229 = scalar_lea.vmem %s172, 129
      %v230 = vld [vmem:[%s229] ss:$2 sm:$0xff]
      %s231 = scalar_lea.vmem %s172, 145
      %v232 = vld [vmem:[%s231] ss:$2 sm:$0xff]
      %s233 = scalar_lea.vmem %s172, 161
      %v234 = vld [vmem:[%s233] ss:$2 sm:$0xff]
      %s235 = scalar_lea.vmem %s172, 177
      %v236 = vld [vmem:[%s235] ss:$2 sm:$0xff]
      %s237 = scalar_lea.vmem %s172, 193
      %v238 = vld [vmem:[%s237] ss:$2 sm:$0xff]
      %s239 = scalar_lea.vmem %s172, 209
      %v240 = vld [vmem:[%s239] ss:$2 sm:$0xff]
      %s241 = scalar_lea.vmem %s172, 225
      %v242 = vld [vmem:[%s241] ss:$2 sm:$0xff]
      %s243 = scalar_lea.vmem %s172, 241
      %v244 = vld [vmem:[%s243] ss:$2 sm:$0xff]
      %v245 = vmax.f32 %v182, %v214
      %v246 = vmax.f32 %v184, %v216
      %v247 = vmax.f32 %v186, %v218
      %v248 = vmax.f32 %v188, %v220
      %v249 = vmax.f32 %v190, %v222
      %v250 = vmax.f32 %v192, %v224
      %v251 = vmax.f32 %v194, %v226
      %v252 = vmax.f32 %v196, %v228
      %v253 = vmax.f32 %v198, %v230
      %v254 = vmax.f32 %v200, %v232
      %v255 = vmax.f32 %v202, %v234
      %v256 = vmax.f32 %v204, %v236
      %v257 = vmax.f32 %v206, %v238
      %v258 = vmax.f32 %v208, %v240
      %v259 = vmax.f32 %v210, %v242
      %v260 = vmax.f32 %v212, %v244
      %v261 = vmax.f32 %v245, %v246
      %v262 = vmax.f32 %v247, %v248
      %v263 = vmax.f32 %v249, %v250
      %v264 = vmax.f32 %v251, %v252
      %v265 = vmax.f32 %v253, %v254
      %v266 = vmax.f32 %v255, %v256
      %v267 = vmax.f32 %v257, %v258
      %v268 = vmax.f32 %v259, %v260
      %vm269 = vcmask 31744
      %270 = vst.msk [vmem:[#allocation2] sm:$0xff] %vm269, 0.0
      %vm271 = vcmask 25600
      %272 = vst.msk [vmem:[#allocation2 + $0x8] sm:$0x3] %vm271, 0.0
      %s273 = scalar_lea.vmem [#allocation2], 144
      %274 = vst.msk [vmem:[%s273] sm:$0xff] %vm269, 0.0
      %275 = vst.msk [vmem:[%s273 + $0x8] sm:$0x3] %vm271, 0.0
      %s276 = scalar_lea.vmem [#allocation2], 16
      %vm277 = vcmask 24576
      %278 = vst.msk [vmem:[%s276] sm:$0x1] %vm277, 0.0
      %279 = vst.msk [vmem:[%s276 + $0x10] sm:$0x1] %vm277, 0.0
      %280 = vst.msk [vmem:[%s276 + $0x20] sm:$0x1] %vm277, 0.0
      %281 = vst.msk [vmem:[%s276 + $0x30] sm:$0x1] %vm277, 0.0
      %282 = vst.msk [vmem:[%s276 + $0x40] sm:$0x1] %vm277, 0.0
      %283 = vst.msk [vmem:[%s276 + $0x50] sm:$0x1] %vm277, 0.0
      %284 = vst.msk [vmem:[%s276 + $0x60] sm:$0x1] %vm277, 0.0
      %285 = vst.msk [vmem:[%s276 + $0x70] sm:$0x1] %vm277, 0.0
      %286 = vst.msk [vmem:[%s276 + $0x9] sm:$0x1] %vm277, 0.0
      %287 = vst.msk [vmem:[%s276 + $0x19] sm:$0x1] %vm277, 0.0
      %288 = vst.msk [vmem:[%s276 + $0x29] sm:$0x1] %vm277, 0.0
      %289 = vst.msk [vmem:[%s276 + $0x39] sm:$0x1] %vm277, 0.0
      %290 = vst.msk [vmem:[%s276 + $0x49] sm:$0x1] %vm277, 0.0
      %291 = vst.msk [vmem:[%s276 + $0x59] sm:$0x1] %vm277, 0.0
      %292 = vst.msk [vmem:[%s276 + $0x69] sm:$0x1] %vm277, 0.0
      %293 = vst.msk [vmem:[%s276 + $0x79] sm:$0x1] %vm277, 0.0
      %294 = vst.msk [vmem:[%s276 + $0x1] sm:$0xff] %vm269, %v261
      %295 = vst.msk [vmem:[%s276 + $0x11] sm:$0xff] %vm269, %v262
      %296 = vst.msk [vmem:[%s276 + $0x21] sm:$0xff] %vm269, %v263
      %297 = vst.msk [vmem:[%s276 + $0x31] sm:$0xff] %vm269, %v264
      %298 = vst.msk [vmem:[%s276 + $0x41] sm:$0xff] %vm269, %v265
      %299 = vst.msk [vmem:[%s276 + $0x51] sm:$0xff] %vm269, %v266
      %300 = vst.msk [vmem:[%s276 + $0x61] sm:$0xff] %vm269, %v267
      %301 = vst.msk [vmem:[%s276 + $0x71] sm:$0xff] %vm269, %v268
      %v302 = vld [vmem:[#allocation2] sm:$0xff]
      %v303 = vld [vmem:[#allocation2 + $0x10] sm:$0xff]
      %v304 = vld [vmem:[#allocation2 + $0x20] sm:$0xff]
      %v305 = vld [vmem:[#allocation2 + $0x30] sm:$0xff]
      %v306 = vld [vmem:[#allocation2 + $0x40] sm:$0xff]
      %v307 = vld [vmem:[#allocation2 + $0x50] sm:$0xff]
      %v308 = vld [vmem:[#allocation2 + $0x60] sm:$0xff]
      %v309 = vld [vmem:[#allocation2 + $0x70] sm:$0xff]
      %310 = vst.msk [vmem:[#allocation3] sm:$0xff] %vm269, %v302
      %311 = vst.msk [vmem:[#allocation3 + $0x8] sm:$0xff] %vm269, %v303
      %312 = vst.msk [vmem:[#allocation3 + $0x10] sm:$0xff] %vm269, %v304
      %313 = vst.msk [vmem:[#allocation3 + $0x18] sm:$0xff] %vm269, %v305
      %314 = vst.msk [vmem:[#allocation3 + $0x20] sm:$0xff] %vm269, %v306
      %315 = vst.msk [vmem:[#allocation3 + $0x28] sm:$0xff] %vm269, %v307
      %316 = vst.msk [vmem:[#allocation3 + $0x30] sm:$0xff] %vm269, %v308
      %317 = vst.msk [vmem:[#allocation3 + $0x38] sm:$0xff] %vm269, %v309
      %v318 = vld [vmem:[#allocation2 + $0x1] sm:$0xff]
      %v319 = vld [vmem:[#allocation2 + $0x11] sm:$0xff]
      %v320 = vld [vmem:[#allocation2 + $0x21] sm:$0xff]
      %v321 = vld [vmem:[#allocation2 + $0x31] sm:$0xff]
      %v322 = vld [vmem:[#allocation2 + $0x41] sm:$0xff]
      %v323 = vld [vmem:[#allocation2 + $0x51] sm:$0xff]
      %v324 = vld [vmem:[#allocation2 + $0x61] sm:$0xff]
      %v325 = vld [vmem:[#allocation2 + $0x71] sm:$0xff]
      %334 = vrot.lane.b32.xlu0 %v318, 4
      %v335 = vpop.permute.xlu0 %334
      %336 = vrot.lane.b32.xlu0 %v319, 4
      %v337 = vpop.permute.xlu0 %336
      %338 = vrot.lane.b32.xlu0 %v320, 4
      %v339 = vpop.permute.xlu0 %338
      %340 = vrot.lane.b32.xlu0 %v321, 4
      %v341 = vpop.permute.xlu0 %340
      %342 = vrot.lane.b32.xlu0 %v322, 4
      %v343 = vpop.permute.xlu0 %342
      %344 = vrot.lane.b32.xlu0 %v323, 4
      %v345 = vpop.permute.xlu0 %344
      %346 = vrot.lane.b32.xlu0 %v324, 4
      %v347 = vpop.permute.xlu0 %346
      %348 = vrot.lane.b32.xlu0 %v325, 4
      %v349 = vpop.permute.xlu0 %348
      %vm358 = vcmask 64544
      %359 = vst.msk [vmem:[#allocation3] sm:$0xff] %vm358, %v335
      %360 = vst.msk [vmem:[#allocation3 + $0x8] sm:$0xff] %vm358, %v337
      %361 = vst.msk [vmem:[#allocation3 + $0x10] sm:$0xff] %vm358, %v339
      %362 = vst.msk [vmem:[#allocation3 + $0x18] sm:$0xff] %vm358, %v341
      %363 = vst.msk [vmem:[#allocation3 + $0x20] sm:$0xff] %vm358, %v343
      %364 = vst.msk [vmem:[#allocation3 + $0x28] sm:$0xff] %vm358, %v345
      %365 = vst.msk [vmem:[#allocation3 + $0x30] sm:$0xff] %vm358, %v347
      %366 = vst.msk [vmem:[#allocation3 + $0x38] sm:$0xff] %vm358, %v349
      %v367 = vld [vmem:[#allocation2 + $0x2] sm:$0xff]
      %v368 = vld [vmem:[#allocation2 + $0x12] sm:$0xff]
      %v369 = vld [vmem:[#allocation2 + $0x22] sm:$0xff]
      %v370 = vld [vmem:[#allocation2 + $0x32] sm:$0xff]
      %v371 = vld [vmem:[#allocation2 + $0x42] sm:$0xff]
      %v372 = vld [vmem:[#allocation2 + $0x52] sm:$0xff]
      %v373 = vld [vmem:[#allocation2 + $0x62] sm:$0xff]
      %v374 = vld [vmem:[#allocation2 + $0x72] sm:$0xff]
      %383 = vrot.lane.b32.xlu0 %v367, 8
      %v384 = vpop.permute.xlu0 %383
      %385 = vrot.lane.b32.xlu0 %v368, 8
      %v386 = vpop.permute.xlu0 %385
      %387 = vrot.lane.b32.xlu0 %v369, 8
      %v388 = vpop.permute.xlu0 %387
      %389 = vrot.lane.b32.xlu0 %v370, 8
      %v390 = vpop.permute.xlu0 %389
      %391 = vrot.lane.b32.xlu0 %v371, 8
      %v392 = vpop.permute.xlu0 %391
      %393 = vrot.lane.b32.xlu0 %v372, 8
      %v394 = vpop.permute.xlu0 %393
      %395 = vrot.lane.b32.xlu0 %v373, 8
      %v396 = vpop.permute.xlu0 %395
      %397 = vrot.lane.b32.xlu0 %v374, 8
      %v398 = vpop.permute.xlu0 %397
      %vm407 = vcmask 97344
      %408 = vst.msk [vmem:[#allocation3] sm:$0xff] %vm407, %v384
      %409 = vst.msk [vmem:[#allocation3 + $0x8] sm:$0xff] %vm407, %v386
      %410 = vst.msk [vmem:[#allocation3 + $0x10] sm:$0xff] %vm407, %v388
      %411 = vst.msk [vmem:[#allocation3 + $0x18] sm:$0xff] %vm407, %v390
      %412 = vst.msk [vmem:[#allocation3 + $0x20] sm:$0xff] %vm407, %v392
      %413 = vst.msk [vmem:[#allocation3 + $0x28] sm:$0xff] %vm407, %v394
      %414 = vst.msk [vmem:[#allocation3 + $0x30] sm:$0xff] %vm407, %v396
      %415 = vst.msk [vmem:[#allocation3 + $0x38] sm:$0xff] %vm407, %v398
      %v416 = vld [vmem:[%s276] sm:$0xff]
      %v417 = vld [vmem:[%s276 + $0x10] sm:$0xff]
      %v418 = vld [vmem:[%s276 + $0x20] sm:$0xff]
      %v419 = vld [vmem:[%s276 + $0x30] sm:$0xff]
      %v420 = vld [vmem:[%s276 + $0x40] sm:$0xff]
      %v421 = vld [vmem:[%s276 + $0x50] sm:$0xff]
      %v422 = vld [vmem:[%s276 + $0x60] sm:$0xff]
      %v423 = vld [vmem:[%s276 + $0x70] sm:$0xff]
      %432 = vrot.lane.b32.xlu0 %v416, 12
      %v433 = vpop.permute.xlu0 %432
      %434 = vrot.lane.b32.xlu0 %v417, 12
      %v435 = vpop.permute.xlu0 %434
      %436 = vrot.lane.b32.xlu0 %v418, 12
      %v437 = vpop.permute.xlu0 %436
      %438 = vrot.lane.b32.xlu0 %v419, 12
      %v439 = vpop.permute.xlu0 %438
      %440 = vrot.lane.b32.xlu0 %v420, 12
      %v441 = vpop.permute.xlu0 %440
      %442 = vrot.lane.b32.xlu0 %v421, 12
      %v443 = vpop.permute.xlu0 %442
      %444 = vrot.lane.b32.xlu0 %v422, 12
      %v445 = vpop.permute.xlu0 %444
      %446 = vrot.lane.b32.xlu0 %v423, 12
      %v447 = vpop.permute.xlu0 %446
      %vm456 = vcmask 130144
      %457 = vst.msk [vmem:[#allocation3] sm:$0xff] %vm456, %v433
      %458 = vst.msk [vmem:[#allocation3 + $0x8] sm:$0xff] %vm456, %v435
      %459 = vst.msk [vmem:[#allocation3 + $0x10] sm:$0xff] %vm456, %v437
      %460 = vst.msk [vmem:[#allocation3 + $0x18] sm:$0xff] %vm456, %v439
      %461 = vst.msk [vmem:[#allocation3 + $0x20] sm:$0xff] %vm456, %v441
      %462 = vst.msk [vmem:[#allocation3 + $0x28] sm:$0xff] %vm456, %v443
      %463 = vst.msk [vmem:[#allocation3 + $0x30] sm:$0xff] %vm456, %v445
      %464 = vst.msk [vmem:[#allocation3 + $0x38] sm:$0xff] %vm456, %v447
      %v465 = vld [vmem:[%s276 + $0x1] sm:$0xff]
      %v466 = vld [vmem:[%s276 + $0x11] sm:$0xff]
      %v467 = vld [vmem:[%s276 + $0x21] sm:$0xff]
      %v468 = vld [vmem:[%s276 + $0x31] sm:$0xff]
      %v469 = vld [vmem:[%s276 + $0x41] sm:$0xff]
      %v470 = vld [vmem:[%s276 + $0x51] sm:$0xff]
      %v471 = vld [vmem:[%s276 + $0x61] sm:$0xff]
      %v472 = vld [vmem:[%s276 + $0x71] sm:$0xff]
      %481 = vrot.lane.b32.xlu0 %v465, 16
      %v482 = vpop.permute.xlu0 %481
      %483 = vrot.lane.b32.xlu0 %v466, 16
      %v484 = vpop.permute.xlu0 %483
      %485 = vrot.lane.b32.xlu0 %v467, 16
      %v486 = vpop.permute.xlu0 %485
      %487 = vrot.lane.b32.xlu0 %v468, 16
      %v488 = vpop.permute.xlu0 %487
      %489 = vrot.lane.b32.xlu0 %v469, 16
      %v490 = vpop.permute.xlu0 %489
      %491 = vrot.lane.b32.xlu0 %v470, 16
      %v492 = vpop.permute.xlu0 %491
      %493 = vrot.lane.b32.xlu0 %v471, 16
      %v494 = vpop.permute.xlu0 %493
      %495 = vrot.lane.b32.xlu0 %v472, 16
      %v496 = vpop.permute.xlu0 %495
      %vm505 = vcmask 162944
      %506 = vst.msk [vmem:[#allocation3] sm:$0xff] %vm505, %v482
      %507 = vst.msk [vmem:[#allocation3 + $0x8] sm:$0xff] %vm505, %v484
      %508 = vst.msk [vmem:[#allocation3 + $0x10] sm:$0xff] %vm505, %v486
      %509 = vst.msk [vmem:[#allocation3 + $0x18] sm:$0xff] %vm505, %v488
      %510 = vst.msk [vmem:[#allocation3 + $0x20] sm:$0xff] %vm505, %v490
      %511 = vst.msk [vmem:[#allocation3 + $0x28] sm:$0xff] %vm505, %v492
      %512 = vst.msk [vmem:[#allocation3 + $0x30] sm:$0xff] %vm505, %v494
      %513 = vst.msk [vmem:[#allocation3 + $0x38] sm:$0xff] %vm505, %v496
      %v514 = vld [vmem:[%s276 + $0x2] sm:$0xff]
      %v515 = vld [vmem:[%s276 + $0x12] sm:$0xff]
      %v516 = vld [vmem:[%s276 + $0x22] sm:$0xff]
      %v517 = vld [vmem:[%s276 + $0x32] sm:$0xff]
      %v518 = vld [vmem:[%s276 + $0x42] sm:$0xff]
      %v519 = vld [vmem:[%s276 + $0x52] sm:$0xff]
      %v520 = vld [vmem:[%s276 + $0x62] sm:$0xff]
      %v521 = vld [vmem:[%s276 + $0x72] sm:$0xff]
      %530 = vrot.lane.b32.xlu0 %v514, 20
      %v531 = vpop.permute.xlu0 %530
      %532 = vrot.lane.b32.xlu0 %v515, 20
      %v533 = vpop.permute.xlu0 %532
      %534 = vrot.lane.b32.xlu0 %v516, 20
      %v535 = vpop.permute.xlu0 %534
      %536 = vrot.lane.b32.xlu0 %v517, 20
      %v537 = vpop.permute.xlu0 %536
      %538 = vrot.lane.b32.xlu0 %v518, 20
      %v539 = vpop.permute.xlu0 %538
      %540 = vrot.lane.b32.xlu0 %v519, 20
      %v541 = vpop.permute.xlu0 %540
      %542 = vrot.lane.b32.xlu0 %v520, 20
      %v543 = vpop.permute.xlu0 %542
      %544 = vrot.lane.b32.xlu0 %v521, 20
      %v545 = vpop.permute.xlu0 %544
      %vm554 = vcmask 195744
      %555 = vst.msk [vmem:[#allocation3] sm:$0xff] %vm554, %v531
      %556 = vst.msk [vmem:[#allocation3 + $0x8] sm:$0xff] %vm554, %v533
      %557 = vst.msk [vmem:[#allocation3 + $0x10] sm:$0xff] %vm554, %v535
      %558 = vst.msk [vmem:[#allocation3 + $0x18] sm:$0xff] %vm554, %v537
      %559 = vst.msk [vmem:[#allocation3 + $0x20] sm:$0xff] %vm554, %v539
      %560 = vst.msk [vmem:[#allocation3 + $0x28] sm:$0xff] %vm554, %v541
      %561 = vst.msk [vmem:[#allocation3 + $0x30] sm:$0xff] %vm554, %v543
      %562 = vst.msk [vmem:[#allocation3 + $0x38] sm:$0xff] %vm554, %v545
      %s563 = scalar_lea.vmem [#allocation2], 32
      %v564 = vld [vmem:[%s563] sm:$0xff]
      %v565 = vld [vmem:[%s563 + $0x10] sm:$0xff]
      %v566 = vld [vmem:[%s563 + $0x20] sm:$0xff]
      %v567 = vld [vmem:[%s563 + $0x30] sm:$0xff]
      %v568 = vld [vmem:[%s563 + $0x40] sm:$0xff]
      %v569 = vld [vmem:[%s563 + $0x50] sm:$0xff]
      %v570 = vld [vmem:[%s563 + $0x60] sm:$0xff]
      %v571 = vld [vmem:[%s563 + $0x70] sm:$0xff]
      %580 = vrot.lane.b32.xlu0 %v564, 24
      %v581 = vpop.permute.xlu0 %580
      %582 = vrot.lane.b32.xlu0 %v565, 24
      %v583 = vpop.permute.xlu0 %582
      %584 = vrot.lane.b32.xlu0 %v566, 24
      %v585 = vpop.permute.xlu0 %584
      %586 = vrot.lane.b32.xlu0 %v567, 24
      %v587 = vpop.permute.xlu0 %586
      %588 = vrot.lane.b32.xlu0 %v568, 24
      %v589 = vpop.permute.xlu0 %588
      %590 = vrot.lane.b32.xlu0 %v569, 24
      %v591 = vpop.permute.xlu0 %590
      %592 = vrot.lane.b32.xlu0 %v570, 24
      %v593 = vpop.permute.xlu0 %592
      %594 = vrot.lane.b32.xlu0 %v571, 24
      %v595 = vpop.permute.xlu0 %594
      %vm604 = vcmask 228544
      %605 = vst.msk [vmem:[#allocation3] sm:$0xff] %vm604, %v581
      %606 = vst.msk [vmem:[#allocation3 + $0x8] sm:$0xff] %vm604, %v583
      %607 = vst.msk [vmem:[#allocation3 + $0x10] sm:$0xff] %vm604, %v585
      %608 = vst.msk [vmem:[#allocation3 + $0x18] sm:$0xff] %vm604, %v587
      %609 = vst.msk [vmem:[#allocation3 + $0x20] sm:$0xff] %vm604, %v589
      %610 = vst.msk [vmem:[#allocation3 + $0x28] sm:$0xff] %vm604, %v591
      %611 = vst.msk [vmem:[#allocation3 + $0x30] sm:$0xff] %vm604, %v593
      %612 = vst.msk [vmem:[#allocation3 + $0x38] sm:$0xff] %vm604, %v595
      %v613 = vld [vmem:[%s563 + $0x1] sm:$0xff]
      %v614 = vld [vmem:[%s563 + $0x11] sm:$0xff]
      %v615 = vld [vmem:[%s563 + $0x21] sm:$0xff]
      %v616 = vld [vmem:[%s563 + $0x31] sm:$0xff]
      %v617 = vld [vmem:[%s563 + $0x41] sm:$0xff]
      %v618 = vld [vmem:[%s563 + $0x51] sm:$0xff]
      %v619 = vld [vmem:[%s563 + $0x61] sm:$0xff]
      %v620 = vld [vmem:[%s563 + $0x71] sm:$0xff]
      %629 = vrot.lane.b32.xlu0 %v613, 28
      %v630 = vpop.permute.xlu0 %629
      %631 = vrot.lane.b32.xlu0 %v614, 28
      %v632 = vpop.permute.xlu0 %631
      %633 = vrot.lane.b32.xlu0 %v615, 28
      %v634 = vpop.permute.xlu0 %633
      %635 = vrot.lane.b32.xlu0 %v616, 28
      %v636 = vpop.permute.xlu0 %635
      %637 = vrot.lane.b32.xlu0 %v617, 28
      %v638 = vpop.permute.xlu0 %637
      %639 = vrot.lane.b32.xlu0 %v618, 28
      %v640 = vpop.permute.xlu0 %639
      %641 = vrot.lane.b32.xlu0 %v619, 28
      %v642 = vpop.permute.xlu0 %641
      %643 = vrot.lane.b32.xlu0 %v620, 28
      %v644 = vpop.permute.xlu0 %643
      %vm653 = vcmask 261344
      %654 = vst.msk [vmem:[#allocation3] sm:$0xff] %vm653, %v630
      %655 = vst.msk [vmem:[#allocation3 + $0x8] sm:$0xff] %vm653, %v632
      %656 = vst.msk [vmem:[#allocation3 + $0x10] sm:$0xff] %vm653, %v634
      %657 = vst.msk [vmem:[#allocation3 + $0x18] sm:$0xff] %vm653, %v636
      %658 = vst.msk [vmem:[#allocation3 + $0x20] sm:$0xff] %vm653, %v638
      %659 = vst.msk [vmem:[#allocation3 + $0x28] sm:$0xff] %vm653, %v640
      %660 = vst.msk [vmem:[#allocation3 + $0x30] sm:$0xff] %vm653, %v642
      %661 = vst.msk [vmem:[#allocation3 + $0x38] sm:$0xff] %vm653, %v644
      %v662 = vld [vmem:[%s563 + $0x2] sm:$0xff]
      %v663 = vld [vmem:[%s563 + $0x12] sm:$0xff]
      %v664 = vld [vmem:[%s563 + $0x22] sm:$0xff]
      %v665 = vld [vmem:[%s563 + $0x32] sm:$0xff]
      %v666 = vld [vmem:[%s563 + $0x42] sm:$0xff]
      %v667 = vld [vmem:[%s563 + $0x52] sm:$0xff]
      %v668 = vld [vmem:[%s563 + $0x62] sm:$0xff]
      %v669 = vld [vmem:[%s563 + $0x72] sm:$0xff]
      %678 = vrot.lane.b32.xlu0 %v662, 32
      %v679 = vpop.permute.xlu0 %678
      %680 = vrot.lane.b32.xlu0 %v663, 32
      %v681 = vpop.permute.xlu0 %680
      %682 = vrot.lane.b32.xlu0 %v664, 32
      %v683 = vpop.permute.xlu0 %682
      %684 = vrot.lane.b32.xlu0 %v665, 32
      %v685 = vpop.permute.xlu0 %684
      %686 = vrot.lane.b32.xlu0 %v666, 32
      %v687 = vpop.permute.xlu0 %686
      %688 = vrot.lane.b32.xlu0 %v667, 32
      %v689 = vpop.permute.xlu0 %688
      %690 = vrot.lane.b32.xlu0 %v668, 32
      %v691 = vpop.permute.xlu0 %690
      %692 = vrot.lane.b32.xlu0 %v669, 32
      %v693 = vpop.permute.xlu0 %692
      %vm702 = vcmask 294144
      %703 = vst.msk [vmem:[#allocation3] sm:$0xff] %vm702, %v679
      %704 = vst.msk [vmem:[#allocation3 + $0x8] sm:$0xff] %vm702, %v681
      %705 = vst.msk [vmem:[#allocation3 + $0x10] sm:$0xff] %vm702, %v683
      %706 = vst.msk [vmem:[#allocation3 + $0x18] sm:$0xff] %vm702, %v685
      %707 = vst.msk [vmem:[#allocation3 + $0x20] sm:$0xff] %vm702, %v687
      %708 = vst.msk [vmem:[#allocation3 + $0x28] sm:$0xff] %vm702, %v689
      %709 = vst.msk [vmem:[#allocation3 + $0x30] sm:$0xff] %vm702, %v691
      %710 = vst.msk [vmem:[#allocation3 + $0x38] sm:$0xff] %vm702, %v693
      %v711 = vld [vmem:[#allocation3] sm:$0xff]
      %v712 = vld [vmem:[#allocation3 + $0x8] sm:$0xff]
      %v713 = vld [vmem:[#allocation3 + $0x10] sm:$0xff]
      %v714 = vld [vmem:[#allocation3 + $0x18] sm:$0xff]
      %v715 = vld [vmem:[#allocation3 + $0x20] sm:$0xff]
      %v716 = vld [vmem:[#allocation3 + $0x28] sm:$0xff]
      %v717 = vld [vmem:[#allocation3 + $0x30] sm:$0xff]
      %v718 = vld [vmem:[#allocation3 + $0x38] sm:$0xff]
      %v719 = vld [vmem:[%s1] sm:$0xff]
      %v720 = vld [vmem:[%s1 + $0x8] sm:$0xff]
      %v721 = vld [vmem:[%s1 + $0x10] sm:$0xff]
      %v722 = vld [vmem:[%s1 + $0x18] sm:$0xff]
      %v723 = vld [vmem:[%s1 + $0x20] sm:$0xf]
      %vm724 = vcmask 293888
      %v726 = vsel %vm724, %v711, 0
      %v729 = vsel %vm724, %v712, 0
      %v732 = vsel %vm724, %v713, 0
      %v735 = vsel %vm724, %v714, 0
      %v738 = vsel %vm724, %v715, 0
      %v741 = vsel %vm724, %v716, 0
      %v744 = vsel %vm724, %v717, 0
      %v747 = vsel %vm724, %v718, 0
      %vm749 = vcmask 1043456
      %v751 = vsel %vm749, %v723, 0
      %753 = vmatpush.msra.mxu0 0.0
      %754 = vmatpush.msra.mxu0 0.0
      %755 = vmatpush.msra.mxu0 0.0
      %756 = vmatpush.msra.mxu0 0.0
      %757 = vmatpush.msra.mxu0 0.0
      %758 = vmatpush.msra.mxu0 0.0
      %759 = vmatpush.msra.mxu0 0.0
      %760 = vmatpush.msra.mxu0 0.0
      %761 = vmatpush.msra.mxu0 0.0
      %762 = vmatpush.msra.mxu0 0.0
      %763 = vmatpush.msra.mxu0 0.0
      %764 = vmatpush.msra.mxu0 %v751
      %765 = vmatpush.msra.mxu0 %v722
      %766 = vmatpush.msra.mxu0 %v721
      %767 = vmatpush.msra.mxu0 %v720
      %768 = vmatpush.msra.mxu0 %v719
      %769 = vmatmul.f32.gmra.mxu0 %v726
      %v770 = vpop.f32.mrf.mxu0
      %v771 = vadd.f32 0.0, %v770
      %772 = vmatmul.f32.gmra.mxu0 %v729
      %v773 = vpop.f32.mrf.mxu0
      %v774 = vadd.f32 0.0, %v773
      %775 = vmatmul.f32.gmra.mxu0 %v732
      %v776 = vpop.f32.mrf.mxu0
      %v777 = vadd.f32 0.0, %v776
      %778 = vmatmul.f32.gmra.mxu0 %v735
      %v779 = vpop.f32.mrf.mxu0
      %v780 = vadd.f32 0.0, %v779
      %781 = vmatmul.f32.gmra.mxu0 %v738
      %v782 = vpop.f32.mrf.mxu0
      %v783 = vadd.f32 0.0, %v782
      %784 = vmatmul.f32.gmra.mxu0 %v741
      %v785 = vpop.f32.mrf.mxu0
      %v786 = vadd.f32 0.0, %v785
      %787 = vmatmul.f32.gmra.mxu0 %v744
      %v788 = vpop.f32.mrf.mxu0
      %v789 = vadd.f32 0.0, %v788
      %790 = vmatmul.f32.gmra.mxu0 %v747
      %v791 = vpop.f32.mrf.mxu0
      %v792 = vadd.f32 0.0, %v791
      %793 = vdwg.mxu0
      %vm794 = vcmask 64512
      %v795 = vsel %vm794, %v771, 0.0
      %v796 = vsel %vm794, %v774, 0.0
      %v797 = vadd.f32 %v795, %v796
      %v798 = vsel %vm794, %v777, 0.0
      %v799 = vadd.f32 %v797, %v798
      %v800 = vsel %vm794, %v780, 0.0
      %v801 = vadd.f32 %v799, %v800
      %v802 = vsel %vm794, %v783, 0.0
      %v803 = vadd.f32 %v801, %v802
      %v804 = vsel %vm794, %v786, 0.0
      %v805 = vadd.f32 %v803, %v804
      %v806 = vsel %vm794, %v789, 0.0
      %v807 = vadd.f32 %v805, %v806
      %v808 = vsel %vm794, %v792, 0.0
      %v809 = vadd.f32 %v807, %v808
      %v810 = vrot.slane %v809, 4
      %v811 = vadd.f32 %v809, %v810
      %v812 = vrot.slane %v811, 2
      %v813 = vadd.f32 %v811, %v812
      %v814 = vrot.slane %v813, 1
      %v815 = vadd.f32 %v813, %v814
      %vm816 = vcmask 57344
      %817 = vst.msk [vmem:[%s181] sm:$0x1] %vm816, %v815
      %v818 = vmul.f32 %v771, %v771
      %v819 = vmul.f32 %v774, %v774
      %v820 = vmul.f32 %v777, %v777
      %v821 = vmul.f32 %v780, %v780
      %v822 = vmul.f32 %v783, %v783
      %v823 = vmul.f32 %v786, %v786
      %v824 = vmul.f32 %v789, %v789
      %v825 = vmul.f32 %v792, %v792
      %v826 = vsel %vm794, %v818, 0.0
      %v827 = vsel %vm794, %v819, 0.0
      %v828 = vadd.f32 %v826, %v827
      %v829 = vsel %vm794, %v820, 0.0
      %v830 = vadd.f32 %v828, %v829
      %v831 = vsel %vm794, %v821, 0.0
      %v832 = vadd.f32 %v830, %v831
      %v833 = vsel %vm794, %v822, 0.0
      %v834 = vadd.f32 %v832, %v833
      %v835 = vsel %vm794, %v823, 0.0
      %v836 = vadd.f32 %v834, %v835
      %v837 = vsel %vm794, %v824, 0.0
      %v838 = vadd.f32 %v836, %v837
      %v839 = vsel %vm794, %v825, 0.0
      %v840 = vadd.f32 %v838, %v839
      %v841 = vrot.slane %v840, 4
      %v842 = vadd.f32 %v840, %v841
      %v843 = vrot.slane %v842, 2
      %v844 = vadd.f32 %v842, %v843
      %v845 = vrot.slane %v844, 1
      %v846 = vadd.f32 %v844, %v845
      %847 = vst.msk [vmem:[%s181 + $0x1] sm:$0x1] %vm816, %v846
      %848 = vst.msk [vmem:[%s177] sm:$0xff] %vm794, %v771
      %849 = vst.msk [vmem:[%s177 + $0x8] sm:$0xff] %vm794, %v774
      %850 = vst.msk [vmem:[%s177 + $0x10] sm:$0xff] %vm794, %v777
      %851 = vst.msk [vmem:[%s177 + $0x18] sm:$0xff] %vm794, %v780
      %852 = vst.msk [vmem:[%s177 + $0x20] sm:$0xff] %vm794, %v783
      %853 = vst.msk [vmem:[%s177 + $0x28] sm:$0xff] %vm794, %v786
      %854 = vst.msk [vmem:[%s177 + $0x30] sm:$0xff] %vm794, %v789
      %855 = vst.msk [vmem:[%s177 + $0x38] sm:$0xff] %vm794, %v792
      %p856 = scmp.lt.s32.totalorder %s15, 1
      %s857 = scalar_select %p856, %s15, 1
      %s858 = smul.addr %s857, 8
      %s859 = smul.addr %s858, 8
      %s860 = scalar_lea.vmem %s2, %s859
      %p861 = scmp.lt.s32.totalorder %s15, 1
      %s862 = scalar_select %p861, %s15, 1
      %s863 = smul.addr %s862, 2
      %s864 = scalar_lea.vmem %s3, %s863
      // Predicated region
      $region29: #{down_forward.3} parent=27 // pred_check
        %p865 = pneg %p80
      $region30: #{down_forward.3} parent=27 // pred_check_branch
        %867 = sbr.rel (%p865) target = $region32
      $region31: #{down_forward.3} parent=27 // pred_region
        _
      $region32: #{down_forward.3} parent=27 // pred_fallthru
        _
      // Predicated region
      $region33: #{down_forward.3} parent=27 // pred_check
        %p868 = pneg %p106
      $region34: #{down_forward.3} parent=27 // pred_check_branch
        %870 = sbr.rel (%p868) target = $region36
      $region35: #{down_forward.3} parent=27 // pred_region
        _
      $region36: #{down_forward.3} parent=27 // pred_fallthru
        _
    $region28: #{down_forward.3} parent=5 // pred_fallthru
      _
    %p871 = scmp.le.s32.totalorder 2, %s10
    // Predicated region
    $region37: #{down_forward.3} parent=5 // pred_check
      %p872 = pneg %p871
    $region38: #{down_forward.3} parent=5 // pred_check_branch
      %874 = sbr.rel (%p872) target = $region40
    $region39: #{down_forward.3} parent=5 // pred_region
      %s875 = ssub.s32 %s10, 2
      // Predicated region
      $region41: #{down_forward.3} parent=39 // pred_check
        %p876 = pneg %p86
      $region42: #{down_forward.3} parent=39 // pred_check_branch
        %878 = sbr.rel (%p876) target = $region44
      $region43: #{down_forward.3} parent=39 // pred_region
        %p879 = scmp.lt.s32.totalorder %s16, 1
        %s880 = scalar_select %p879, %s16, 1
        %s881 = smul.addr %s880, 8
        %s882 = smul.addr %s881, 8
        %s883 = scalar_lea.vmem %s2, %s882
      $region44: #{down_forward.3} parent=39 // pred_fallthru
        _
      // Predicated region
      $region45: #{down_forward.3} parent=39 // pred_check
        %p884 = pneg %p112
      $region46: #{down_forward.3} parent=39 // pred_check_branch
        %886 = sbr.rel (%p884) target = $region48
      $region47: #{down_forward.3} parent=39 // pred_region
        %p887 = scmp.lt.s32.totalorder %s16, 1
        %s888 = scalar_select %p887, %s16, 1
        %s889 = smul.addr %s888, 2
        %s890 = scalar_lea.vmem %s3, %s889
      $region48: #{down_forward.3} parent=39 // pred_fallthru
        _
    $region40: #{down_forward.3} parent=5 // pred_fallthru
      _
  $region6: #{down_forward.3} parent=0 // loop_footer
    %s14 = sadd.s32 1, %s10
  $region7: #{down_forward.3} parent=0 // loop_footer_branch
    %9 = sbr.rel target = $region3
  $region8: #{down_forward.3} parent=0 // loop_exit
    _

// kernel: down_forward.4
$region0: #{down_forward.4}
  #allocation0 [shape = 'u32[]', space=smem, size = 0x4, offset = 0x4, fixed_abs, tag = 'smem constant byte address 0x4 - core index']
  #allocation1 [shape = 'u32[72,128]{1,0:T(1,128)}', space=vmem, size = 0x9000, scoped, tag = 'internal scratch']
  #allocation2 [shape = 'f32[10,10,8]{2,1,0:T(8,128)}', space=vmem, size = 0x14000, scoped, tag = 'scratch operand']
  #allocation3 [shape = 'f32[64,72]{1,0:T(8,128)}', space=vmem, size = 0x8000, scoped, tag = 'scratch operand']
  %s0 = inlined_call_operand.vmem [shape: f32[2,64,8], index: 0, kind: input, shape index: {}]
  %s1 = inlined_call_operand.vmem [shape: f32[2,8], index: 1, kind: input, shape index: {}]
  %s2 = inlined_call_operand.vmem [shape: f32[72,8], index: 2, kind: input, shape index: {}]
  %s3 = inlined_call_operand.vmem [shape: f32[2,64,8], index: 3, kind: output, shape index: {0}]
  %s4 = inlined_call_operand.vmem [shape: f32[2,2,8], index: 4, kind: output, shape index: {1}]
  %5 = xla_tuple %s3, %s4
  %s6 = sld [smem:[#allocation0]]
  $region53: #{down_forward.4} parent=0
    _
  %s8 = ssub.s32 1, %s6
  %s9 = scalar_select 0, %s8, %s6
  loop: start=0, step=1, limit=4
  $region2: #{down_forward.4} parent=0 // loop_pre_header
    _
  $region3: #{down_forward.4} parent=0 // loop_header
    %s11 = sphi 0, %s15
    %p12 = scmp.ge.s32.totalorder %s11, 4
    %s21 = sphi 0, %s23
    %s24 = sphi 0, %s21
    %s25 = sphi 0, %s24
    %s41 = sphi 0, %s25
    %s45 = sphi 0, %s45
    %s47 = sphi 0, %s45
    %s48 = sphi 0, %s47
    %s62 = sphi 0, %s48
    %s66 = sphi 0, %s66
    %s68 = sphi 0, %s66
    %s69 = sphi 0, %s68
    %s83 = sphi 0, %s69
    %s89 = sphi 0, %s91
    %s92 = sphi 0, %s89
    %s93 = sphi 0, %s92
    %s109 = sphi 0, %s93
    %s115 = sphi 0, %s117
    %s118 = sphi 0, %s115
    %s119 = sphi 0, %s118
    %s135 = sphi 0, %s119
  $region4: #{down_forward.4} parent=0 // loop_header_branch
    %14 = sbr.rel (%p12) target = $region8
  $region5: #{down_forward.4} parent=0 // loop_body
    %s16 = ssub.s32 %s11, 1
    %s17 = ssub.s32 %s11, 2
    %s18 = sadd.s32 %s11, 1
    %s19 = ssub.s32 %s11, %s18
    %p20 = scmp.eq.s32.totalorder %s19, 0
    %s22 = sadd.s32 %s21, 1
    %s23 = scalar_select %p20, %s21, %s22
    %p26 = pneg %p20
    %p27 = scmp.eq.s32.totalorder %s11, 1
    %p28 = por %p26, %p27
    %p29 = scmp.ne.s32.totalorder %s21, %s24
    %p30 = scmp.eq.s32.totalorder %s11, 0
    %p31 = por %p29, %p30
    %p32 = scmp.ne.s32.totalorder %s21, %s24
    %p33 = scmp.eq.s32.totalorder %s16, 1
    %p34 = por %p32, %p33
    %p35 = scmp.ne.s32.totalorder %s24, %s25
    %p36 = scmp.eq.s32.totalorder %s16, 0
    %p37 = por %p35, %p36
    %p38 = scmp.ne.s32.totalorder %s24, %s25
    %p39 = scmp.eq.s32.totalorder %s17, 1
    %p40 = por %p38, %p39
    %p42 = scmp.ne.s32.totalorder %s25, %s41
    %p43 = scmp.eq.s32.totalorder %s17, 0
    %p44 = por %p42, %p43
    %s46 = sadd.s32 %s45, 1
    %p49 = scmp.eq.s32.totalorder %s11, 1
    %p50 = scmp.ne.s32.totalorder %s45, %s47
    %p51 = scmp.eq.s32.totalorder %s11, 0
    %p52 = por %p50, %p51
    %p53 = scmp.ne.s32.totalorder %s45, %s47
    %p54 = scmp.eq.s32.totalorder %s16, 1
    %p55 = por %p53, %p54
    %p56 = scmp.ne.s32.totalorder %s47, %s48
    %p57 = scmp.eq.s32.totalorder %s16, 0
    %p58 = por %p56, %p57
    %p59 = scmp.ne.s32.totalorder %s47, %s48
    %p60 = scmp.eq.s32.totalorder %s17, 1
    %p61 = por %p59, %p60
    %p63 = scmp.ne.s32.totalorder %s48, %s62
    %p64 = scmp.eq.s32.totalorder %s17, 0
    %p65 = por %p63, %p64
    %s67 = sadd.s32 %s66, 1
    %p70 = scmp.eq.s32.totalorder %s11, 1
    %p71 = scmp.ne.s32.totalorder %s66, %s68
    %p72 = scmp.eq.s32.totalorder %s11, 0
    %p73 = por %p71, %p72
    %p74 = scmp.ne.s32.totalorder %s66, %s68
    %p75 = scmp.eq.s32.totalorder %s16, 1
    %p76 = por %p74, %p75
    %p77 = scmp.ne.s32.totalorder %s68, %s69
    %p78 = scmp.eq.s32.totalorder %s16, 0
    %p79 = por %p77, %p78
    %p80 = scmp.ne.s32.totalorder %s68, %s69
    %p81 = scmp.eq.s32.totalorder %s17, 1
    %p82 = por %p80, %p81
    %p84 = scmp.ne.s32.totalorder %s69, %s83
    %p85 = scmp.eq.s32.totalorder %s17, 0
    %p86 = por %p84, %p85
    %s87 = ssub.s32 %s11, %s18
    %p88 = scmp.eq.s32.totalorder %s87, 0
    %s90 = sadd.s32 %s89, 1
    %s91 = scalar_select %p88, %s89, %s90
    %p94 = pneg %p88
    %p95 = scmp.eq.s32.totalorder %s11, 1
    %p96 = por %p94, %p95
    %p97 = scmp.ne.s32.totalorder %s89, %s92
    %p98 = scmp.eq.s32.totalorder %s11, 0
    %p99 = por %p97, %p98
    %p100 = scmp.ne.s32.totalorder %s89, %s92
    %p101 = scmp.eq.s32.totalorder %s16, 1
    %p102 = por %p100, %p101
    %p103 = scmp.ne.s32.totalorder %s92, %s93
    %p104 = scmp.eq.s32.totalorder %s16, 0
    %p105 = por %p103, %p104
    %p106 = scmp.ne.s32.totalorder %s92, %s93
    %p107 = scmp.eq.s32.totalorder %s17, 1
    %p108 = por %p106, %p107
    %p110 = scmp.ne.s32.totalorder %s93, %s109
    %p111 = scmp.eq.s32.totalorder %s17, 0
    %p112 = por %p110, %p111
    %s113 = ssub.s32 %s11, %s18
    %p114 = scmp.eq.s32.totalorder %s113, 0
    %s116 = sadd.s32 %s115, 1
    %s117 = scalar_select %p114, %s115, %s116
    %p120 = pneg %p114
    %p121 = scmp.eq.s32.totalorder %s11, 1
    %p122 = por %p120, %p121
    %p123 = scmp.ne.s32.totalorder %s115, %s118
    %p124 = scmp.eq.s32.totalorder %s11, 0
    %p125 = por %p123, %p124
    %p126 = scmp.ne.s32.totalorder %s115, %s118
    %p127 = scmp.eq.s32.totalorder %s16, 1
    %p128 = por %p126, %p127
    %p129 = scmp.ne.s32.totalorder %s118, %s119
    %p130 = scmp.eq.s32.totalorder %s16, 0
    %p131 = por %p129, %p130
    %p132 = scmp.ne.s32.totalorder %s118, %s119
    %p133 = scmp.eq.s32.totalorder %s17, 1
    %p134 = por %p132, %p133
    %p136 = scmp.ne.s32.totalorder %s119, %s135
    %p137 = scmp.eq.s32.totalorder %s17, 0
    %p138 = por %p136, %p137
    %p139 = scmp.le.s32.totalorder 1, %s11
    %p140 = scmp.lt.s32.totalorder %s11, 3
    %p141 = pnand %p139, %p140
    %p142 = pneg %p141
    // Predicated region
    $region9: #{down_forward.4} parent=5 // pred_check
      _
    $region10: #{down_forward.4} parent=5 // pred_check_branch
      %144 = sbr.rel (%p141) target = $region12
    $region11: #{down_forward.4} parent=5 // pred_region
      %s145 = ssub.s32 %s11, 1
      // Predicated region
      $region13: #{down_forward.4} parent=11 // pred_check
        %p146 = pneg %p58
      $region14: #{down_forward.4} parent=11 // pred_check_branch
        %148 = sbr.rel (%p146) target = $region16
      $region15: #{down_forward.4} parent=11 // pred_region
        _
      $region16: #{down_forward.4} parent=11 // pred_fallthru
        _
      // Predicated region
      $region17: #{down_forward.4} parent=11 // pred_check
        %p149 = pneg %p79
      $region18: #{down_forward.4} parent=11 // pred_check_branch
        %151 = sbr.rel (%p149) target = $region20
      $region19: #{down_forward.4} parent=11 // pred_region
        _
      $region20: #{down_forward.4} parent=11 // pred_fallthru
        _
    $region12: #{down_forward.4} parent=5 // pred_fallthru
      _
    %p152 = scmp.lt.s32.totalorder %s11, 2
    // Predicated region
    $region21: #{down_forward.4} parent=5 // pred_check
      %p153 = pneg %p152
    $region22: #{down_forward.4} parent=5 // pred_check_branch
      %155 = sbr.rel (%p153) target = $region24
    $region23: #{down_forward.4} parent=5 // pred_region
      // Predicated region
      $region25: #{down_forward.4} parent=23 // pred_check
        %p156 = pneg %p31
      $region26: #{down_forward.4} parent=23 // pred_check_branch
        %158 = sbr.rel (%p156) target = $region28
      $region27: #{down_forward.4} parent=23 // pred_region
        %p159 = scmp.lt.s32.totalorder %s11, 1
        %s160 = scalar_select %p159, %s11, 1
        %s161 = smul.addr %s160, 8
        %s162 = smul.addr %s161, 8
        %s163 = scalar_lea.vmem %s0, %s162
      $region28: #{down_forward.4} parent=23 // pred_fallthru
        _
    $region24: #{down_forward.4} parent=5 // pred_fallthru
      _
    %p164 = scmp.le.s32.totalorder 1, %s11
    %p165 = scmp.lt.s32.totalorder %s11, 3
    %p166 = pnand %p164, %p165
    %p167 = pneg %p166
    // Predicated region
    $region29: #{down_forward.4} parent=5 // pred_check
      _
    $region30: #{down_forward.4} parent=5 // pred_check_branch
      %169 = sbr.rel (%p166) target = $region32
    $region31: #{down_forward.4} parent=5 // pred_region
      %s170 = ssub.s32 %s11, 1
      %p171 = scmp.lt.s32.totalorder %s16, 1
      %s172 = scalar_select %p171, %s16, 1
      %s173 = smul.addr %s172, 8
      %s174 = smul.addr %s173, 8
      %s175 = scalar_lea.vmem %s0, %s174
      %p176 = pneg %p37
      %p177 = pneg %p34
      %p178 = pneg %p58
      %p179 = pneg %p55
      %p180 = pneg %p79
      %p181 = pneg %p76
      %p182 = pneg %p105
      %p183 = pneg %p102
      %p184 = scmp.lt.s32.totalorder %s16, 1
      %s185 = scalar_select %p184, %s16, 1
      %s186 = smul.addr %s185, 8
      %s187 = smul.addr %s186, 8
      %s188 = scalar_lea.vmem %s3, %s187
      %p189 = pneg %p131
      %p190 = pneg %p128
      %p191 = scmp.lt.s32.totalorder %s16, 1
      %s192 = scalar_select %p191, %s16, 1
      %s193 = smul.addr %s192, 2
      %s194 = scalar_lea.vmem %s4, %s193
      %p195 = scmp.lt.s32.totalorder %s16, 1
      %s196 = scalar_select %p195, %s16, 1
      %s197 = smul.addr %s196, 8
      %s198 = smul.addr %s197, 8
      %s199 = scalar_lea.vmem %s0, %s198
      %p200 = scmp.lt.s32.totalorder %s16, 1
      %s201 = scalar_select %p200, %s16, 1
      %s202 = smul.addr %s201, 8
      %s203 = smul.addr %s202, 8
      %s204 = scalar_lea.vmem %s3, %s203
      %p205 = scmp.lt.s32.totalorder %s16, 1
      %s206 = scalar_select %p205, %s16, 1
      %s207 = smul.addr %s206, 2
      %s208 = scalar_lea.vmem %s4, %s207
      %v209 = vld [vmem:[%s1] sm:$0x1]
      %v210 = vld [vmem:[%s1 + $0x1] sm:$0x1]
      %v211 = vld [vmem:[%s199] sm:$0xff]
      %v212 = vld [vmem:[%s199 + $0x8] sm:$0xff]
      %v213 = vld [vmem:[%s199 + $0x10] sm:$0xff]
      %v214 = vld [vmem:[%s199 + $0x18] sm:$0xff]
      %v215 = vld [vmem:[%s199 + $0x20] sm:$0xff]
      %v216 = vld [vmem:[%s199 + $0x28] sm:$0xff]
      %v217 = vld [vmem:[%s199 + $0x30] sm:$0xff]
      %v218 = vld [vmem:[%s199 + $0x38] sm:$0xff]
      %v219 = vperm.slane %v209, 0
      %v220 = vmul.f32 %v211, %v219
      %v221 = vmul.f32 %v212, %v219
      %v222 = vmul.f32 %v213, %v219
      %v223 = vmul.f32 %v214, %v219
      %v224 = vmul.f32 %v215, %v219
      %v225 = vmul.f32 %v216, %v219
      %v226 = vmul.f32 %v217, %v219
      %v227 = vmul.f32 %v218, %v219
      %v228 = vperm.slane %v210, 0
      %v229 = vadd.f32 %v220, %v228
      %v230 = vadd.f32 %v221, %v228
      %v231 = vadd.f32 %v222, %v228
      %v232 = vadd.f32 %v223, %v228
      %v233 = vadd.f32 %v224, %v228
      %v234 = vadd.f32 %v225, %v228
      %v235 = vadd.f32 %v226, %v228
      %v236 = vadd.f32 %v227, %v228
      %v237 = vmax.f32 %v229, 0.0
      %v238 = vmax.f32 %v230, 0.0
      %v239 = vmax.f32 %v231, 0.0
      %v240 = vmax.f32 %v232, 0.0
      %v241 = vmax.f32 %v233, 0.0
      %v242 = vmax.f32 %v234, 0.0
      %v243 = vmax.f32 %v235, 0.0
      %v244 = vmax.f32 %v236, 0.0
      %vm245 = vcmask 64512
      %246 = vst.msk [vmem:[#allocation2] sm:$0xff] %vm245, 0.0
      %vm247 = vcmask 58368
      %248 = vst.msk [vmem:[#allocation2 + $0x8] sm:$0x3] %vm247, 0.0
      %s249 = scalar_lea.vmem [#allocation2], 144
      %250 = vst.msk [vmem:[%s249] sm:$0xff] %vm245, 0.0
      %251 = vst.msk [vmem:[%s249 + $0x8] sm:$0x3] %vm247, 0.0
      %s252 = scalar_lea.vmem [#allocation2], 16
      %vm253 = vcmask 57344
      %254 = vst.msk [vmem:[%s252] sm:$0x1] %vm253, 0.0
      %255 = vst.msk [vmem:[%s252 + $0x10] sm:$0x1] %vm253, 0.0
      %256 = vst.msk [vmem:[%s252 + $0x20] sm:$0x1] %vm253, 0.0
      %257 = vst.msk [vmem:[%s252 + $0x30] sm:$0x1] %vm253, 0.0
      %258 = vst.msk [vmem:[%s252 + $0x40] sm:$0x1] %vm253, 0.0
      %259 = vst.msk [vmem:[%s252 + $0x50] sm:$0x1] %vm253, 0.0
      %260 = vst.msk [vmem:[%s252 + $0x60] sm:$0x1] %vm253, 0.0
      %261 = vst.msk [vmem:[%s252 + $0x70] sm:$0x1] %vm253, 0.0
      %262 = vst.msk [vmem:[%s252 + $0x9] sm:$0x1] %vm253, 0.0
      %263 = vst.msk [vmem:[%s252 + $0x19] sm:$0x1] %vm253, 0.0
      %264 = vst.msk [vmem:[%s252 + $0x29] sm:$0x1] %vm253, 0.0
      %265 = vst.msk [vmem:[%s252 + $0x39] sm:$0x1] %vm253, 0.0
      %266 = vst.msk [vmem:[%s252 + $0x49] sm:$0x1] %vm253, 0.0
      %267 = vst.msk [vmem:[%s252 + $0x59] sm:$0x1] %vm253, 0.0
      %268 = vst.msk [vmem:[%s252 + $0x69] sm:$0x1] %vm253, 0.0
      %269 = vst.msk [vmem:[%s252 + $0x79] sm:$0x1] %vm253, 0.0
      %270 = vst.msk [vmem:[%s252 + $0x1] sm:$0xff] %vm245, %v237
      %271 = vst.msk [vmem:[%s252 + $0x11] sm:$0xff] %vm245, %v238
      %272 = vst.msk [vmem:[%s252 + $0x21] sm:$0xff] %vm245, %v239
      %273 = vst.msk [vmem:[%s252 + $0x31] sm:$0xff] %vm245, %v240
      %274 = vst.msk [vmem:[%s252 + $0x41] sm:$0xff] %vm245, %v241
      %275 = vst.msk [vmem:[%s252 + $0x51] sm:$0xff] %vm245, %v242
      %276 = vst.msk [vmem:[%s252 + $0x61] sm:$0xff] %vm245, %v243
      %277 = vst.msk [vmem:[%s252 + $0x71] sm:$0xff] %vm245, %v244
      %v278 = vld [vmem:[#allocation2] sm:$0xff]
      %v279 = vld [vmem:[#allocation2 + $0x10] sm:$0xff]
      %v280 = vld [vmem:[#allocation2 + $0x20] sm:$0xff]
      %v281 = vld [vmem:[#allocation2 + $0x30] sm:$0xff]
      %v282 = vld [vmem:[#allocation2 + $0x40] sm:$0xff]
      %v283 = vld [vmem:[#allocation2 + $0x50] sm:$0xff]
      %v284 = vld [vmem:[#allocation2 + $0x60] sm:$0xff]
      %v285 = vld [vmem:[#allocation2 + $0x70] sm:$0xff]
      %286 = vst.msk [vmem:[#allocation3] sm:$0xff] %vm245, %v278
      %287 = vst.msk [vmem:[#allocation3 + $0x8] sm:$0xff] %vm245, %v279
      %288 = vst.msk [vmem:[#allocation3 + $0x10] sm:$0xff] %vm245, %v280
      %289 = vst.msk [vmem:[#allocation3 + $0x18] sm:$0xff] %vm245, %v281
      %290 = vst.msk [vmem:[#allocation3 + $0x20] sm:$0xff] %vm245, %v282
      %291 = vst.msk [vmem:[#allocation3 + $0x28] sm:$0xff] %vm245, %v283
      %292 = vst.msk [vmem:[#allocation3 + $0x30] sm:$0xff] %vm245, %v284
      %293 = vst.msk [vmem:[#allocation3 + $0x38] sm:$0xff] %vm245, %v285
      %v294 = vld [vmem:[#allocation2 + $0x1] sm:$0xff]
      %v295 = vld [vmem:[#allocation2 + $0x11] sm:$0xff]
      %v296 = vld [vmem:[#allocation2 + $0x21] sm:$0xff]
      %v297 = vld [vmem:[#allocation2 + $0x31] sm:$0xff]
      %v298 = vld [vmem:[#allocation2 + $0x41] sm:$0xff]
      %v299 = vld [vmem:[#allocation2 + $0x51] sm:$0xff]
      %v300 = vld [vmem:[#allocation2 + $0x61] sm:$0xff]
      %v301 = vld [vmem:[#allocation2 + $0x71] sm:$0xff]
      %310 = vrot.lane.b32.xlu0 %v294, 8
      %v311 = vpop.permute.xlu0 %310
      %312 = vrot.lane.b32.xlu0 %v295, 8
      %v313 = vpop.permute.xlu0 %312
      %314 = vrot.lane.b32.xlu0 %v296, 8
      %v315 = vpop.permute.xlu0 %314
      %316 = vrot.lane.b32.xlu0 %v297, 8
      %v317 = vpop.permute.xlu0 %316
      %318 = vrot.lane.b32.xlu0 %v298, 8
      %v319 = vpop.permute.xlu0 %318
      %320 = vrot.lane.b32.xlu0 %v299, 8
      %v321 = vpop.permute.xlu0 %320
      %322 = vrot.lane.b32.xlu0 %v300, 8
      %v323 = vpop.permute.xlu0 %322
      %324 = vrot.lane.b32.xlu0 %v301, 8
      %v325 = vpop.permute.xlu0 %324
      %vm334 = vcmask 130112
      %335 = vst.msk [vmem:[#allocation3] sm:$0xff] %vm334, %v311
      %336 = vst.msk [vmem:[#allocation3 + $0x8] sm:$0xff] %vm334, %v313
      %337 = vst.msk [vmem:[#allocation3 + $0x10] sm:$0xff] %vm334, %v315
      %338 = vst.msk [vmem:[#allocation3 + $0x18] sm:$0xff] %vm334, %v317
      %339 = vst.msk [vmem:[#allocation3 + $0x20] sm:$0xff] %vm334, %v319
      %340 = vst.msk [vmem:[#allocation3 + $0x28] sm:$0xff] %vm334, %v321
      %341 = vst.msk [vmem:[#allocation3 + $0x30] sm:$0xff] %vm334, %v323
      %342 = vst.msk [vmem:[#allocation3 + $0x38] sm:$0xff] %vm334, %v325
      %v343 = vld [vmem:[#allocation2 + $0x2] sm:$0xff]
      %v344 = vld [vmem:[#allocation2 + $0x12] sm:$0xff]
      %v345 = vld [vmem:[#allocation2 + $0x22] sm:$0xff]
      %v346 = vld [vmem:[#allocation2 + $0x32] sm:$0xff]
      %v347 = vld [vmem:[#allocation2 + $0x42] sm:$0xff]
      %v348 = vld [vmem:[#allocation2 + $0x52] sm:$0xff]
      %v349 = vld [vmem:[#allocation2 + $0x62] sm:$0xff]
      %v350 = vld [vmem:[#allocation2 + $0x72] sm:$0xff]
      %359 = vrot.lane.b32.xlu0 %v343, 16
      %v360 = vpop.permute.xlu0 %359
      %361 = vrot.lane.b32.xlu0 %v344, 16
      %v362 = vpop.permute.xlu0 %361
      %363 = vrot.lane.b32.xlu0 %v345, 16
      %v364 = vpop.permute.xlu0 %363
      %365 = vrot.lane.b32.xlu0 %v346, 16
      %v366 = vpop.permute.xlu0 %365
      %367 = vrot.lane.b32.xlu0 %v347, 16
      %v368 = vpop.permute.xlu0 %367
      %369 = vrot.lane.b32.xlu0 %v348, 16
      %v370 = vpop.permute.xlu0 %369
      %371 = vrot.lane.b32.xlu0 %v349, 16
      %v372 = vpop.permute.xlu0 %371
      %373 = vrot.lane.b32.xlu0 %v350, 16
      %v374 = vpop.permute.xlu0 %373
      %vm383 = vcmask 195712
      %384 = vst.msk [vmem:[#allocation3] sm:$0xff] %vm383, %v360
      %385 = vst.msk [vmem:[#allocation3 + $0x8] sm:$0xff] %vm383, %v362
      %386 = vst.msk [vmem:[#allocation3 + $0x10] sm:$0xff] %vm383, %v364
      %387 = vst.msk [vmem:[#allocation3 + $0x18] sm:$0xff] %vm383, %v366
      %388 = vst.msk [vmem:[#allocation3 + $0x20] sm:$0xff] %vm383, %v368
      %389 = vst.msk [vmem:[#allocation3 + $0x28] sm:$0xff] %vm383, %v370
      %390 = vst.msk [vmem:[#allocation3 + $0x30] sm:$0xff] %vm383, %v372
      %391 = vst.msk [vmem:[#allocation3 + $0x38] sm:$0xff] %vm383, %v374
      %v392 = vld [vmem:[%s252] sm:$0xff]
      %v393 = vld [vmem:[%s252 + $0x10] sm:$0xff]
      %v394 = vld [vmem:[%s252 + $0x20] sm:$0xff]
      %v395 = vld [vmem:[%s252 + $0x30] sm:$0xff]
      %v396 = vld [vmem:[%s252 + $0x40] sm:$0xff]
      %v397 = vld [vmem:[%s252 + $0x50] sm:$0xff]
      %v398 = vld [vmem:[%s252 + $0x60] sm:$0xff]
      %v399 = vld [vmem:[%s252 + $0x70] sm:$0xff]
      %408 = vrot.lane.b32.xlu0 %v392, 24
      %v409 = vpop.permute.xlu0 %408
      %410 = vrot.lane.b32.xlu0 %v393, 24
      %v411 = vpop.permute.xlu0 %410
      %412 = vrot.lane.b32.xlu0 %v394, 24
      %v413 = vpop.permute.xlu0 %412
      %414 = vrot.lane.b32.xlu0 %v395, 24
      %v415 = vpop.permute.xlu0 %414
      %416 = vrot.lane.b32.xlu0 %v396, 24
      %v417 = vpop.permute.xlu0 %416
      %418 = vrot.lane.b32.xlu0 %v397, 24
      %v419 = vpop.permute.xlu0 %418
      %420 = vrot.lane.b32.xlu0 %v398, 24
      %v421 = vpop.permute.xlu0 %420
      %422 = vrot.lane.b32.xlu0 %v399, 24
      %v423 = vpop.permute.xlu0 %422
      %vm432 = vcmask 261312
      %433 = vst.msk [vmem:[#allocation3] sm:$0xff] %vm432, %v409
      %434 = vst.msk [vmem:[#allocation3 + $0x8] sm:$0xff] %vm432, %v411
      %435 = vst.msk [vmem:[#allocation3 + $0x10] sm:$0xff] %vm432, %v413
      %436 = vst.msk [vmem:[#allocation3 + $0x18] sm:$0xff] %vm432, %v415
      %437 = vst.msk [vmem:[#allocation3 + $0x20] sm:$0xff] %vm432, %v417
      %438 = vst.msk [vmem:[#allocation3 + $0x28] sm:$0xff] %vm432, %v419
      %439 = vst.msk [vmem:[#allocation3 + $0x30] sm:$0xff] %vm432, %v421
      %440 = vst.msk [vmem:[#allocation3 + $0x38] sm:$0xff] %vm432, %v423
      %v441 = vld [vmem:[%s252 + $0x1] sm:$0xff]
      %v442 = vld [vmem:[%s252 + $0x11] sm:$0xff]
      %v443 = vld [vmem:[%s252 + $0x21] sm:$0xff]
      %v444 = vld [vmem:[%s252 + $0x31] sm:$0xff]
      %v445 = vld [vmem:[%s252 + $0x41] sm:$0xff]
      %v446 = vld [vmem:[%s252 + $0x51] sm:$0xff]
      %v447 = vld [vmem:[%s252 + $0x61] sm:$0xff]
      %v448 = vld [vmem:[%s252 + $0x71] sm:$0xff]
      %457 = vrot.lane.b32.xlu0 %v441, 32
      %v458 = vpop.permute.xlu0 %457
      %459 = vrot.lane.b32.xlu0 %v442, 32
      %v460 = vpop.permute.xlu0 %459
      %461 = vrot.lane.b32.xlu0 %v443, 32
      %v462 = vpop.permute.xlu0 %461
      %463 = vrot.lane.b32.xlu0 %v444, 32
      %v464 = vpop.permute.xlu0 %463
      %465 = vrot.lane.b32.xlu0 %v445, 32
      %v466 = vpop.permute.xlu0 %465
      %467 = vrot.lane.b32.xlu0 %v446, 32
      %v468 = vpop.permute.xlu0 %467
      %469 = vrot.lane.b32.xlu0 %v447, 32
      %v470 = vpop.permute.xlu0 %469
      %471 = vrot.lane.b32.xlu0 %v448, 32
      %v472 = vpop.permute.xlu0 %471
      %vm481 = vcmask 326912
      %482 = vst.msk [vmem:[#allocation3] sm:$0xff] %vm481, %v458
      %483 = vst.msk [vmem:[#allocation3 + $0x8] sm:$0xff] %vm481, %v460
      %484 = vst.msk [vmem:[#allocation3 + $0x10] sm:$0xff] %vm481, %v462
      %485 = vst.msk [vmem:[#allocation3 + $0x18] sm:$0xff] %vm481, %v464
      %486 = vst.msk [vmem:[#allocation3 + $0x20] sm:$0xff] %vm481, %v466
      %487 = vst.msk [vmem:[#allocation3 + $0x28] sm:$0xff] %vm481, %v468
      %488 = vst.msk [vmem:[#allocation3 + $0x30] sm:$0xff] %vm481, %v470
      %489 = vst.msk [vmem:[#allocation3 + $0x38] sm:$0xff] %vm481, %v472
      %v490 = vld [vmem:[%s252 + $0x2] sm:$0xff]
      %v491 = vld [vmem:[%s252 + $0x12] sm:$0xff]
      %v492 = vld [vmem:[%s252 + $0x22] sm:$0xff]
      %v493 = vld [vmem:[%s252 + $0x32] sm:$0xff]
      %v494 = vld [vmem:[%s252 + $0x42] sm:$0xff]
      %v495 = vld [vmem:[%s252 + $0x52] sm:$0xff]
      %v496 = vld [vmem:[%s252 + $0x62] sm:$0xff]
      %v497 = vld [vmem:[%s252 + $0x72] sm:$0xff]
      %506 = vrot.lane.b32.xlu0 %v490, 40
      %v507 = vpop.permute.xlu0 %506
      %508 = vrot.lane.b32.xlu0 %v491, 40
      %v509 = vpop.permute.xlu0 %508
      %510 = vrot.lane.b32.xlu0 %v492, 40
      %v511 = vpop.permute.xlu0 %510
      %512 = vrot.lane.b32.xlu0 %v493, 40
      %v513 = vpop.permute.xlu0 %512
      %514 = vrot.lane.b32.xlu0 %v494, 40
      %v515 = vpop.permute.xlu0 %514
      %516 = vrot.lane.b32.xlu0 %v495, 40
      %v517 = vpop.permute.xlu0 %516
      %518 = vrot.lane.b32.xlu0 %v496, 40
      %v519 = vpop.permute.xlu0 %518
      %520 = vrot.lane.b32.xlu0 %v497, 40
      %v521 = vpop.permute.xlu0 %520
      %vm530 = vcmask 392512
      %531 = vst.msk [vmem:[#allocation3] sm:$0xff] %vm530, %v507
      %532 = vst.msk [vmem:[#allocation3 + $0x8] sm:$0xff] %vm530, %v509
      %533 = vst.msk [vmem:[#allocation3 + $0x10] sm:$0xff] %vm530, %v511
      %534 = vst.msk [vmem:[#allocation3 + $0x18] sm:$0xff] %vm530, %v513
      %535 = vst.msk [vmem:[#allocation3 + $0x20] sm:$0xff] %vm530, %v515
      %536 = vst.msk [vmem:[#allocation3 + $0x28] sm:$0xff] %vm530, %v517
      %537 = vst.msk [vmem:[#allocation3 + $0x30] sm:$0xff] %vm530, %v519
      %538 = vst.msk [vmem:[#allocation3 + $0x38] sm:$0xff] %vm530, %v521
      %s539 = scalar_lea.vmem [#allocation2], 32
      %v540 = vld [vmem:[%s539] sm:$0xff]
      %v541 = vld [vmem:[%s539 + $0x10] sm:$0xff]
      %v542 = vld [vmem:[%s539 + $0x20] sm:$0xff]
      %v543 = vld [vmem:[%s539 + $0x30] sm:$0xff]
      %v544 = vld [vmem:[%s539 + $0x40] sm:$0xff]
      %v545 = vld [vmem:[%s539 + $0x50] sm:$0xff]
      %v546 = vld [vmem:[%s539 + $0x60] sm:$0xff]
      %v547 = vld [vmem:[%s539 + $0x70] sm:$0xff]
      %556 = vrot.lane.b32.xlu0 %v540, 48
      %v557 = vpop.permute.xlu0 %556
      %558 = vrot.lane.b32.xlu0 %v541, 48
      %v559 = vpop.permute.xlu0 %558
      %560 = vrot.lane.b32.xlu0 %v542, 48
      %v561 = vpop.permute.xlu0 %560
      %562 = vrot.lane.b32.xlu0 %v543, 48
      %v563 = vpop.permute.xlu0 %562
      %564 = vrot.lane.b32.xlu0 %v544, 48
      %v565 = vpop.permute.xlu0 %564
      %566 = vrot.lane.b32.xlu0 %v545, 48
      %v567 = vpop.permute.xlu0 %566
      %568 = vrot.lane.b32.xlu0 %v546, 48
      %v569 = vpop.permute.xlu0 %568
      %570 = vrot.lane.b32.xlu0 %v547, 48
      %v571 = vpop.permute.xlu0 %570
      %vm580 = vcmask 458112
      %581 = vst.msk [vmem:[#allocation3] sm:$0xff] %vm580, %v557
      %582 = vst.msk [vmem:[#allocation3 + $0x8] sm:$0xff] %vm580, %v559
      %583 = vst.msk [vmem:[#allocation3 + $0x10] sm:$0xff] %vm580, %v561
      %584 = vst.msk [vmem:[#allocation3 + $0x18] sm:$0xff] %vm580, %v563
      %585 = vst.msk [vmem:[#allocation3 + $0x20] sm:$0xff] %vm580, %v565
      %586 = vst.msk [vmem:[#allocation3 + $0x28] sm:$0xff] %vm580, %v567
      %587 = vst.msk [vmem:[#allocation3 + $0x30] sm:$0xff] %vm580, %v569
      %588 = vst.msk [vmem:[#allocation3 + $0x38] sm:$0xff] %vm580, %v571
      %v589 = vld [vmem:[%s539 + $0x1] sm:$0xff]
      %v590 = vld [vmem:[%s539 + $0x11] sm:$0xff]
      %v591 = vld [vmem:[%s539 + $0x21] sm:$0xff]
      %v592 = vld [vmem:[%s539 + $0x31] sm:$0xff]
      %v593 = vld [vmem:[%s539 + $0x41] sm:$0xff]
      %v594 = vld [vmem:[%s539 + $0x51] sm:$0xff]
      %v595 = vld [vmem:[%s539 + $0x61] sm:$0xff]
      %v596 = vld [vmem:[%s539 + $0x71] sm:$0xff]
      %605 = vrot.lane.b32.xlu0 %v589, 56
      %v606 = vpop.permute.xlu0 %605
      %607 = vrot.lane.b32.xlu0 %v590, 56
      %v608 = vpop.permute.xlu0 %607
      %609 = vrot.lane.b32.xlu0 %v591, 56
      %v610 = vpop.permute.xlu0 %609
      %611 = vrot.lane.b32.xlu0 %v592, 56
      %v612 = vpop.permute.xlu0 %611
      %613 = vrot.lane.b32.xlu0 %v593, 56
      %v614 = vpop.permute.xlu0 %613
      %615 = vrot.lane.b32.xlu0 %v594, 56
      %v616 = vpop.permute.xlu0 %615
      %617 = vrot.lane.b32.xlu0 %v595, 56
      %v618 = vpop.permute.xlu0 %617
      %619 = vrot.lane.b32.xlu0 %v596, 56
      %v620 = vpop.permute.xlu0 %619
      %vm629 = vcmask 523712
      %630 = vst.msk [vmem:[#allocation3] sm:$0xff] %vm629, %v606
      %631 = vst.msk [vmem:[#allocation3 + $0x8] sm:$0xff] %vm629, %v608
      %632 = vst.msk [vmem:[#allocation3 + $0x10] sm:$0xff] %vm629, %v610
      %633 = vst.msk [vmem:[#allocation3 + $0x18] sm:$0xff] %vm629, %v612
      %634 = vst.msk [vmem:[#allocation3 + $0x20] sm:$0xff] %vm629, %v614
      %635 = vst.msk [vmem:[#allocation3 + $0x28] sm:$0xff] %vm629, %v616
      %636 = vst.msk [vmem:[#allocation3 + $0x30] sm:$0xff] %vm629, %v618
      %637 = vst.msk [vmem:[#allocation3 + $0x38] sm:$0xff] %vm629, %v620
      %v638 = vld [vmem:[%s539 + $0x2] sm:$0xff]
      %v639 = vld [vmem:[%s539 + $0x12] sm:$0xff]
      %v640 = vld [vmem:[%s539 + $0x22] sm:$0xff]
      %v641 = vld [vmem:[%s539 + $0x32] sm:$0xff]
      %v642 = vld [vmem:[%s539 + $0x42] sm:$0xff]
      %v643 = vld [vmem:[%s539 + $0x52] sm:$0xff]
      %v644 = vld [vmem:[%s539 + $0x62] sm:$0xff]
      %v645 = vld [vmem:[%s539 + $0x72] sm:$0xff]
      %654 = vrot.lane.b32.xlu0 %v638, 64
      %v655 = vpop.permute.xlu0 %654
      %656 = vrot.lane.b32.xlu0 %v639, 64
      %v657 = vpop.permute.xlu0 %656
      %658 = vrot.lane.b32.xlu0 %v640, 64
      %v659 = vpop.permute.xlu0 %658
      %660 = vrot.lane.b32.xlu0 %v641, 64
      %v661 = vpop.permute.xlu0 %660
      %662 = vrot.lane.b32.xlu0 %v642, 64
      %v663 = vpop.permute.xlu0 %662
      %664 = vrot.lane.b32.xlu0 %v643, 64
      %v665 = vpop.permute.xlu0 %664
      %666 = vrot.lane.b32.xlu0 %v644, 64
      %v667 = vpop.permute.xlu0 %666
      %668 = vrot.lane.b32.xlu0 %v645, 64
      %v669 = vpop.permute.xlu0 %668
      %vm678 = vcmask 589312
      %679 = vst.msk [vmem:[#allocation3] sm:$0xff] %vm678, %v655
      %680 = vst.msk [vmem:[#allocation3 + $0x8] sm:$0xff] %vm678, %v657
      %681 = vst.msk [vmem:[#allocation3 + $0x10] sm:$0xff] %vm678, %v659
      %682 = vst.msk [vmem:[#allocation3 + $0x18] sm:$0xff] %vm678, %v661
      %683 = vst.msk [vmem:[#allocation3 + $0x20] sm:$0xff] %vm678, %v663
      %684 = vst.msk [vmem:[#allocation3 + $0x28] sm:$0xff] %vm678, %v665
      %685 = vst.msk [vmem:[#allocation3 + $0x30] sm:$0xff] %vm678, %v667
      %686 = vst.msk [vmem:[#allocation3 + $0x38] sm:$0xff] %vm678, %v669
      %v687 = vld [vmem:[#allocation3] sm:$0xff]
      %v688 = vld [vmem:[#allocation3 + $0x8] sm:$0xff]
      %v689 = vld [vmem:[#allocation3 + $0x10] sm:$0xff]
      %v690 = vld [vmem:[#allocation3 + $0x18] sm:$0xff]
      %v691 = vld [vmem:[#allocation3 + $0x20] sm:$0xff]
      %v692 = vld [vmem:[#allocation3 + $0x28] sm:$0xff]
      %v693 = vld [vmem:[#allocation3 + $0x30] sm:$0xff]
      %v694 = vld [vmem:[#allocation3 + $0x38] sm:$0xff]
      %v695 = vld [vmem:[%s2] sm:$0xff]
      %v696 = vld [vmem:[%s2 + $0x8] sm:$0xff]
      %v697 = vld [vmem:[%s2 + $0x10] sm:$0xff]
      %v698 = vld [vmem:[%s2 + $0x18] sm:$0xff]
      %v699 = vld [vmem:[%s2 + $0x20] sm:$0xff]
      %v700 = vld [vmem:[%s2 + $0x28] sm:$0xff]
      %v701 = vld [vmem:[%s2 + $0x30] sm:$0xff]
      %v702 = vld [vmem:[%s2 + $0x38] sm:$0xff]
      %v703 = vld [vmem:[%s2 + $0x40] sm:$0xff]
      %vm704 = vcmask 588800
      %v706 = vsel %vm704, %v687, 0
      %v709 = vsel %vm704, %v688, 0
      %v712 = vsel %vm704, %v689, 0
      %v715 = vsel %vm704, %v690, 0
      %v718 = vsel %vm704, %v691, 0
      %v721 = vsel %vm704, %v692, 0
      %v724 = vsel %vm704, %v693, 0
      %v727 = vsel %vm704, %v694, 0
      %729 = vmatpush.msra.mxu0 0.0
      %730 = vmatpush.msra.mxu0 0.0
      %731 = vmatpush.msra.mxu0 0.0
      %732 = vmatpush.msra.mxu0 0.0
      %733 = vmatpush.msra.mxu0 0.0
      %734 = vmatpush.msra.mxu0 0.0
      %735 = vmatpush.msra.mxu0 0.0
      %736 = vmatpush.msra.mxu0 %v703
      %737 = vmatpush.msra.mxu0 %v702
      %738 = vmatpush.msra.mxu0 %v701
      %739 = vmatpush.msra.mxu0 %v700
      %740 = vmatpush.msra.mxu0 %v699
      %741 = vmatpush.msra.mxu0 %v698
      %742 = vmatpush.msra.mxu0 %v697
      %743 = vmatpush.msra.mxu0 %v696
      %744 = vmatpush.msra.mxu0 %v695
      %745 = vmatmul.f32.gmra.mxu0 %v706
      %v746 = vpop.f32.mrf.mxu0
      %v747 = vadd.f32 0.0, %v746
      %748 = vmatmul.f32.gmra.mxu0 %v709
      %v749 = vpop.f32.mrf.mxu0
      %v750 = vadd.f32 0.0, %v749
      %751 = vmatmul.f32.gmra.mxu0 %v712
      %v752 = vpop.f32.mrf.mxu0
      %v753 = vadd.f32 0.0, %v752
      %754 = vmatmul.f32.gmra.mxu0 %v715
      %v755 = vpop.f32.mrf.mxu0
      %v756 = vadd.f32 0.0, %v755
      %757 = vmatmul.f32.gmra.mxu0 %v718
      %v758 = vpop.f32.mrf.mxu0
      %v759 = vadd.f32 0.0, %v758
      %760 = vmatmul.f32.gmra.mxu0 %v721
      %v761 = vpop.f32.mrf.mxu0
      %v762 = vadd.f32 0.0, %v761
      %763 = vmatmul.f32.gmra.mxu0 %v724
      %v764 = vpop.f32.mrf.mxu0
      %v765 = vadd.f32 0.0, %v764
      %766 = vmatmul.f32.gmra.mxu0 %v727
      %v767 = vpop.f32.mrf.mxu0
      %v768 = vadd.f32 0.0, %v767
      %769 = vdwg.mxu0
      %v770 = vsel %vm245, %v747, 0.0
      %v771 = vsel %vm245, %v750, 0.0
      %v772 = vadd.f32 %v770, %v771
      %v773 = vsel %vm245, %v753, 0.0
      %v774 = vadd.f32 %v772, %v773
      %v775 = vsel %vm245, %v756, 0.0
      %v776 = vadd.f32 %v774, %v775
      %v777 = vsel %vm245, %v759, 0.0
      %v778 = vadd.f32 %v776, %v777
      %v779 = vsel %vm245, %v762, 0.0
      %v780 = vadd.f32 %v778, %v779
      %v781 = vsel %vm245, %v765, 0.0
      %v782 = vadd.f32 %v780, %v781
      %v783 = vsel %vm245, %v768, 0.0
      %v784 = vadd.f32 %v782, %v783
      %v785 = vrot.slane %v784, 4
      %v786 = vadd.f32 %v784, %v785
      %v787 = vrot.slane %v786, 2
      %v788 = vadd.f32 %v786, %v787
      %v789 = vrot.slane %v788, 1
      %v790 = vadd.f32 %v788, %v789
      %791 = vst.msk [vmem:[%s208] sm:$0x1] %vm253, %v790
      %v792 = vmul.f32 %v747, %v747
      %v793 = vmul.f32 %v750, %v750
      %v794 = vmul.f32 %v753, %v753
      %v795 = vmul.f32 %v756, %v756
      %v796 = vmul.f32 %v759, %v759
      %v797 = vmul.f32 %v762, %v762
      %v798 = vmul.f32 %v765, %v765
      %v799 = vmul.f32 %v768, %v768
      %v800 = vsel %vm245, %v792, 0.0
      %v801 = vsel %vm245, %v793, 0.0
      %v802 = vadd.f32 %v800, %v801
      %v803 = vsel %vm245, %v794, 0.0
      %v804 = vadd.f32 %v802, %v803
      %v805 = vsel %vm245, %v795, 0.0
      %v806 = vadd.f32 %v804, %v805
      %v807 = vsel %vm245, %v796, 0.0
      %v808 = vadd.f32 %v806, %v807
      %v809 = vsel %vm245, %v797, 0.0
      %v810 = vadd.f32 %v808, %v809
      %v811 = vsel %vm245, %v798, 0.0
      %v812 = vadd.f32 %v810, %v811
      %v813 = vsel %vm245, %v799, 0.0
      %v814 = vadd.f32 %v812, %v813
      %v815 = vrot.slane %v814, 4
      %v816 = vadd.f32 %v814, %v815
      %v817 = vrot.slane %v816, 2
      %v818 = vadd.f32 %v816, %v817
      %v819 = vrot.slane %v818, 1
      %v820 = vadd.f32 %v818, %v819
      %821 = vst.msk [vmem:[%s208 + $0x1] sm:$0x1] %vm253, %v820
      %822 = vst.msk [vmem:[%s204] sm:$0xff] %vm245, %v747
      %823 = vst.msk [vmem:[%s204 + $0x8] sm:$0xff] %vm245, %v750
      %824 = vst.msk [vmem:[%s204 + $0x10] sm:$0xff] %vm245, %v753
      %825 = vst.msk [vmem:[%s204 + $0x18] sm:$0xff] %vm245, %v756
      %826 = vst.msk [vmem:[%s204 + $0x20] sm:$0xff] %vm245, %v759
      %827 = vst.msk [vmem:[%s204 + $0x28] sm:$0xff] %vm245, %v762
      %828 = vst.msk [vmem:[%s204 + $0x30] sm:$0xff] %vm245, %v765
      %829 = vst.msk [vmem:[%s204 + $0x38] sm:$0xff] %vm245, %v768
      %p830 = scmp.lt.s32.totalorder %s16, 1
      %s831 = scalar_select %p830, %s16, 1
      %s832 = smul.addr %s831, 8
      %s833 = smul.addr %s832, 8
      %s834 = scalar_lea.vmem %s3, %s833
      %p835 = scmp.lt.s32.totalorder %s16, 1
      %s836 = scalar_select %p835, %s16, 1
      %s837 = smul.addr %s836, 2
      %s838 = scalar_lea.vmem %s4, %s837
      // Predicated region
      $region33: #{down_forward.4} parent=31 // pred_check
        %p839 = pneg %p102
      $region34: #{down_forward.4} parent=31 // pred_check_branch
        %841 = sbr.rel (%p839) target = $region36
      $region35: #{down_forward.4} parent=31 // pred_region
        _
      $region36: #{down_forward.4} parent=31 // pred_fallthru
        _
      // Predicated region
      $region37: #{down_forward.4} parent=31 // pred_check
        %p842 = pneg %p128
      $region38: #{down_forward.4} parent=31 // pred_check_branch
        %844 = sbr.rel (%p842) target = $region40
      $region39: #{down_forward.4} parent=31 // pred_region
        _
      $region40: #{down_forward.4} parent=31 // pred_fallthru
        _
    $region32: #{down_forward.4} parent=5 // pred_fallthru
      _
    %p845 = scmp.le.s32.totalorder 2, %s11
    // Predicated region
    $region41: #{down_forward.4} parent=5 // pred_check
      %p846 = pneg %p845
    $region42: #{down_forward.4} parent=5 // pred_check_branch
      %848 = sbr.rel (%p846) target = $region44
    $region43: #{down_forward.4} parent=5 // pred_region
      %s849 = ssub.s32 %s11, 2
      // Predicated region
      $region45: #{down_forward.4} parent=43 // pred_check
        %p850 = pneg %p108
      $region46: #{down_forward.4} parent=43 // pred_check_branch
        %852 = sbr.rel (%p850) target = $region48
      $region47: #{down_forward.4} parent=43 // pred_region
        %p853 = scmp.lt.s32.totalorder %s17, 1
        %s854 = scalar_select %p853, %s17, 1
        %s855 = smul.addr %s854, 8
        %s856 = smul.addr %s855, 8
        %s857 = scalar_lea.vmem %s3, %s856
      $region48: #{down_forward.4} parent=43 // pred_fallthru
        _
      // Predicated region
      $region49: #{down_forward.4} parent=43 // pred_check
        %p858 = pneg %p134
      $region50: #{down_forward.4} parent=43 // pred_check_branch
        %860 = sbr.rel (%p858) target = $region52
      $region51: #{down_forward.4} parent=43 // pred_region
        %p861 = scmp.lt.s32.totalorder %s17, 1
        %s862 = scalar_select %p861, %s17, 1
        %s863 = smul.addr %s862, 2
        %s864 = scalar_lea.vmem %s4, %s863
      $region52: #{down_forward.4} parent=43 // pred_fallthru
        _
    $region44: #{down_forward.4} parent=5 // pred_fallthru
      _
  $region6: #{down_forward.4} parent=0 // loop_footer
    %s15 = sadd.s32 1, %s11
  $region7: #{down_forward.4} parent=0 // loop_footer_branch
    %10 = sbr.rel target = $region3
  $region8: #{down_forward.4} parent=0 // loop_exit
    _

</llo_original>
